<compile_context>
chip_gen: v7x
topology: tpu7x:2x2x1
jax: 0.10.0
libtpu: 0.0.40
codegen_flags: <defaults>
</compile_context>

<pallas_src>
import functools
import math

import jax
import jax.numpy as jnp
from jax import lax
from jax.experimental import pallas as pl
from jax.experimental.pallas import tpu as pltpu


def _gcn_group_kernel(x_ref, adj_ref, w_ref, bias_ref, out_ref, y_scratch,
                      *, add_loop, Fg, Ci, Co, aggregate_first):
    """One (group g, batch-block i) step of DenseGCNConv2d.

    x_ref    : (Bb, N, Fg*Ci)   x_ref[b, n, f*Ci + c] = x[b, c, n, g*Fg + f]
    adj_ref  : (Bb, N, N)       raw adjacency for group g
    w_ref    : (Ci, Co)         group-g 1x1-conv weight (pre-transposed)
    bias_ref : (1, Fg*Co)       bias tiled over f (zeros if module bias is None)
    out_ref  : (Bb, N, Fg*Co)   out_ref[b, n, f*Co + o]
    y_scratch: (Bb, N, Fg*Co)   VMEM scratch (used on the channel-mix-first path)
    """
    g = pl.program_id(0)
    Bb, N, _ = adj_ref.shape

    # ---- adjacency normalization (VPU / EUP) --------------------------------
    a = adj_ref[...].astype(jnp.float32)                        # (Bb, N, N)
    if add_loop:
        # torch: adj[:, i, i, :] += 1 for i in range(N) on the 4-D adj
        # -> for group g (< N), add 1 to row n == g, all columns.
        row = lax.broadcasted_iota(jnp.int32, (Bb, N, N), 1)
        a = a + (row == g).astype(jnp.float32)
    deg = jnp.sum(a, axis=-1)                                   # (Bb, N)
    inv = lax.rsqrt(jnp.maximum(deg, 1.0))                      # clamp(min=1) ** -0.5
    a = inv[:, :, None] * a * inv[:, None, :]                   # normalized adjacency

    bias = bias_ref[...]                                        # (1, Fg*Co), hoisted
    w = jnp.broadcast_to(w_ref[...], (Bb, Ci, Co))              # tiny Bb-wide bcast, hoisted

    if aggregate_first:
        # Ci <= Co: aggregate first (contraction width = min(Ci, Co)).
        # One lane-dense batched matmul over the whole (Fg*Ci) lane dim.
        u = jnp.einsum('bnm,bmq->bnq', a, x_ref[...],
                       preferred_element_type=jnp.float32)      # (Bb, N, Fg*Ci)
        for f in range(Fg):                                     # small static loop
            uf = u[:, :, f * Ci:(f + 1) * Ci]                   # (Bb, N, Ci)
            zf = jnp.einsum('bnc,bco->bno', uf, w,
                            preferred_element_type=jnp.float32)  # (Bb, N, Co)
            zf = zf + bias[:, f * Co:(f + 1) * Co][None]
            out_ref[:, :, f * Co:(f + 1) * Co] = zf.astype(out_ref.dtype)
    else:
        # Co < Ci: channel mix first, then one lane-dense aggregation.
        for f in range(Fg):
            xf = x_ref[:, :, f * Ci:(f + 1) * Ci]               # (Bb, N, Ci)
            yf = jnp.einsum('bnc,bco->bno', xf, w,
                            preferred_element_type=jnp.float32)  # (Bb, N, Co)
            y_scratch[:, :, f * Co:(f + 1) * Co] = yf
        z = jnp.einsum('bnm,bmq->bnq', a, y_scratch[...],
                       preferred_element_type=jnp.float32)       # (Bb, N, Fg*Co)
        out_ref[...] = (z + bias[None]).astype(out_ref.dtype)


def _padded_bytes(shape, itemsize=4):
    """f32 VMEM bytes of a block after (8, 128) tile padding."""
    shape = tuple(int(d) for d in shape)
    if len(shape) == 1:
        return itemsize * (-(-shape[0] // 128) * 128)
    lead = 1
    for d in shape[:-2]:
        lead *= d
    sub = -(-shape[-2] // 8) * 8
    lane = -(-shape[-1] // 128) * 128
    return itemsize * lead * sub * lane


def _vmem_capacity_bytes():
    try:
        return int(pltpu.get_tpu_info().vmem_capacity_bytes)
    except Exception:
        return 64 * 1024 * 1024  # conservative (v7x per-core VMEM)


def _pick_batch_block(B, N, FgCi, FgCo, Ci, Co, budget):
    """Largest divisor of B whose padded, double-buffered working set fits budget."""
    def working_set(bb):
        x_blk = _padded_bytes((bb, N, FgCi))
        a_blk = _padded_bytes((bb, N, N))
        o_blk = _padded_bytes((bb, N, FgCo))
        temps = (_padded_bytes((bb, N, N)) + _padded_bytes((bb, N, max(FgCi, FgCo)))
                 + _padded_bytes((bb, N, FgCo)) + _padded_bytes((bb, Ci, Co)))
        fixed = 2 * _padded_bytes((Ci, Co)) + 2 * _padded_bytes((1, FgCo))
        return 2 * (x_blk + a_blk + o_blk) + temps + fixed

    bb = B
    while bb > 1 and working_set(bb) > budget:
        bb -= 1
        while B % bb:
            bb -= 1
    return max(bb, 1)


def dense_gcn_conv2d_forward(x, adj, weight, bias=None, *, groups=1, add_loop=True):
    """DenseGCNConv2d.forward.

    x      : (B, C_in, N, F) float
    adj    : (B, G, N, N)    float  (add_loop indexing requires N <= G, as in torch)
    weight : (G*C_out, C_in, 1, 1)  grouped 1x1-conv weight (Group_Linear.group_mlp)
    bias   : (C_out,) or None
    returns: (B, C_out, N, F) float32
    """
    B, Ci, N, F = x.shape
    G = groups
    assert F % G == 0, "F must be divisible by groups"
    Fg = F // G
    assert weight.shape[0] % G == 0 and weight.shape[1] == Ci
    Co = weight.shape[0] // G
    assert adj.shape == (B, G, N, N)
    if add_loop:
        assert N <= G, "add_loop=True requires N <= groups (as in the PyTorch module)"

    x = x.astype(jnp.float32)
    adj = adj.astype(jnp.float32)

    # Per-group weight (Ci, Co) and bias tiled over f -> lane-dense (1, Fg*Co).
    w_k = weight.reshape(G, Co, Ci).transpose(0, 2, 1).astype(jnp.float32)
    if bias is None:
        bias_k = jnp.zeros((1, Fg * Co), jnp.float32)
    else:
        bias_k = jnp.tile(bias.astype(jnp.float32).reshape(1, Co), (1, Fg))

    # x_k[g, b, n, f*Ci + c] = x[b, c, n, g*Fg + f]  (one XLA transpose pass over x;
    # the adjacency needs no wrapper transpose -- its group axis is blocked by the
    # BlockSpec index_map directly from the original (B, G, N, N) layout).
    x_k = (x.reshape(B, Ci, N, G, Fg)
             .transpose(3, 0, 2, 4, 1)
             .reshape(G, B, N, Fg * Ci))

    aggregate_first = Ci <= Co

    cap = _vmem_capacity_bytes()
    budget = int(0.35 * cap)
    Bb = _pick_batch_block(B, N, Fg * Ci, Fg * Co, Ci, Co, budget)
    if G == 1 and B > 1 and Bb == B:
        # Keep >= 2 grid steps so both v7x TensorCores get work.
        Bb = max(d for d in range(1, B) if B % d == 0)
    grid = (G, B // Bb)

    kernel = functools.partial(
        _gcn_group_kernel, add_loop=add_loop, Fg=Fg, Ci=Ci, Co=Co,
        aggregate_first=aggregate_first)

    out_k = pl.pallas_call(
        kernel,
        out_shape=jax.ShapeDtypeStruct((B, G, N, Fg * Co), jnp.float32),
        grid=grid,
        in_specs=[
            pl.BlockSpec((None, Bb, N, Fg * Ci), lambda g, i: (g, i, 0, 0)),  # x_k
            pl.BlockSpec((Bb, None, N, N), lambda g, i: (i, g, 0, 0)),        # adj
            pl.BlockSpec((None, Ci, Co), lambda g, i: (g, 0, 0)),             # weight
            pl.BlockSpec((1, Fg * Co), lambda g, i: (0, 0)),                  # bias
        ],
        out_specs=pl.BlockSpec((Bb, None, N, Fg * Co), lambda g, i: (i, g, 0, 0)),
        scratch_shapes=[pltpu.VMEM((Bb, N, Fg * Co), jnp.float32)],
        compiler_params=pltpu.CompilerParams(
            dimension_semantics=("parallel", "parallel"),
            vmem_limit_bytes=int(0.8 * cap)),
    )(x_k, adj, w_k, bias_k)

    # (B, G, N, Fg*Co) -> (B, Co, N, F):  out[b, o, n, g*Fg+f] = out_k[b, g, n, f*Co+o]
    out = (out_k.reshape(B, G, N, Fg, Co)
                 .transpose(0, 4, 2, 1, 3)
                 .reshape(B, Co, N, F))
    return out


def _reference(x, adj, weight, bias, groups, add_loop=True):
    """Pure-JAX mirror of the PyTorch module, for verification."""
    B, C, N, F = x.shape
    G = groups
    Co = weight.shape[0] // G
    hi = lax.Precision.HIGHEST

    # norm (faithful to `adj[:, idx, idx] += 1` on the 4-D adj)
    adj = adj.astype(jnp.float32)
    if add_loop:
        idx = jnp.arange(N)
        adj = adj.at[:, idx, idx].add(1.0)
    dis = jnp.maximum(adj.sum(-1), 1.0) ** -0.5
    adj = dis[..., :, None] * adj * dis[..., None, :]
    adj = adj[:, None]                                           # [B,1,G,N,N]

    # Group_Linear(x, is_reshape=False)
    xx = x.reshape(B, C, N, G, -1).transpose(0, 1, 3, 2, 4)      # [B,C,G,N,Fg]
    xx = xx.transpose(0, 2, 1, 3, 4)                             # [B,G,C,N,Fg]
    w = weight.reshape(G, Co, C)
    y = jnp.einsum('goc,bgcnf->bgonf', w, xx, precision=hi)      # grouped 1x1 conv
    y = y.transpose(0, 2, 1, 3, 4)                               # [B,Co,G,N,Fg]

    out = jnp.matmul(adj, y, precision=hi)                       # [B,Co,G,N,Fg]
    out = out.transpose(0, 1, 3, 2, 4).reshape(B, Co, N, -1)     # [B,Co,N,F]
    if bias is not None:
        out = jnp.swapaxes(out, 1, -1) + bias
        out = jnp.swapaxes(out, 1, -1)
    return out


if __name__ == "__main__":
    # Small shapes consistent with the module (N <= G required by the original
    # `adj[:, idx, idx] += 1` indexing on the [B, G, N, N] adjacency).
    B, Ci, Co, G, N, F = 2, 4, 8, 4, 4, 16

    key = jax.random.PRNGKey(0)
    kx, ka, kw, kb = jax.random.split(key, 4)
    x = jax.random.normal(kx, (B, Ci, N, F), jnp.float32)
    adj = jax.random.uniform(ka, (B, G, N, N), jnp.float32)       # non-negative weights
    bound = 1.0 / math.sqrt(Ci)
    weight = jax.random.uniform(kw, (G * Co, Ci, 1, 1), jnp.float32, -bound, bound)
    bias = 0.1 * jax.random.normal(kb, (Co,), jnp.float32)

    fwd = jax.jit(functools.partial(dense_gcn_conv2d_forward, groups=G, add_loop=True))
    out = jax.block_until_ready(fwd(x, adj, weight, bias))

    ref = _reference(x, adj, weight, bias, G, True)
    assert out.shape == (B, Co, N, F)
    assert out.dtype == jnp.float32
    assert jnp.allclose(out, ref, rtol=1e-4, atol=1e-4), "Pallas kernel mismatch vs reference"

    print("KERNEL_OK")
</pallas_src>

<mosaic_0001>
module attributes {stable_mosaic.version = 11 : i64} {
  func.func @_gcn_group_kernel(%arg0: i32, %arg1: i32, %arg2: memref<1x2x4x16xf32, #tpu.memory_space<vmem>>, %arg3: memref<2x1x4x4xf32, #tpu.memory_space<vmem>>, %arg4: memref<1x4x8xf32, #tpu.memory_space<vmem>>, %arg5: memref<1x32xf32, #tpu.memory_space<vmem>>, %arg6: memref<2x1x4x32xf32, #tpu.memory_space<vmem>>, %arg7: memref<2x4x32xf32, #tpu.memory_space<vmem>>) attributes {dimension_semantics = [#tpu.dimension_semantics<parallel>, #tpu.dimension_semantics<parallel>], iteration_bounds = array<i64: 4, 1>, scalar_prefetch = 0 : i64, scratch_operands = 1 : i64, tpu.core_type = #tpu.core_type<tc>, window_params = [{transform_indices = @transform_0, window_bounds = array<i64: 1, 2, 4, 16>}, {transform_indices = @transform_1, window_bounds = array<i64: 2, 1, 4, 4>}, {transform_indices = @transform_2, window_bounds = array<i64: 1, 4, 8>}, {pipeline_mode = #tpu.pipeline_mode<synchronous>, transform_indices = @transform_3, window_bounds = array<i64: 1, 32>}, {transform_indices = @transform_4, window_bounds = array<i64: 2, 1, 4, 32>}]} {
    %c0 = arith.constant 0 : index
    %c0_0 = arith.constant 0 : index
    %c0_1 = arith.constant 0 : index
    %c0_2 = arith.constant 0 : index
    %0 = vector.load %arg3[%c0, %c0_0, %c0_1, %c0_2] : memref<2x1x4x4xf32, #tpu.memory_space<vmem>>, vector<2x1x4x4xf32>
    %1 = vector.shape_cast %0 : vector<2x1x4x4xf32> to vector<2x4x4xf32>
    %2 = tpu.iota {dimensions = array<i32: 1>} : vector<2x4x4xi32>
    %3 = vector.broadcast %arg0 : i32 to vector<2x4x4xi32>
    %4 = arith.cmpi eq, %2, %3 : vector<2x4x4xi32>
    %5 = arith.extui %4 : vector<2x4x4xi1> to vector<2x4x4xi32>
    %6 = arith.sitofp %5 : vector<2x4x4xi32> to vector<2x4x4xf32>
    %7 = arith.addf %1, %6 : vector<2x4x4xf32>
    %cst = arith.constant dense<0.000000e+00> : vector<2x4xf32>
    %8 = vector.multi_reduction <add>, %7, %cst [2] : vector<2x4x4xf32> to vector<2x4xf32>
    %cst_3 = arith.constant 1.000000e+00 : f32
    %9 = vector.broadcast %cst_3 : f32 to vector<2x4xf32>
    %10 = arith.maximumf %8, %9 : vector<2x4xf32>
    %11 = math.rsqrt %10 : vector<2x4xf32>
    %12 = vector.shape_cast %11 : vector<2x4xf32> to vector<2x4x1xf32>
    %13 = vector.broadcast %12 : vector<2x4x1xf32> to vector<2x4x4xf32>
    %14 = arith.mulf %13, %7 : vector<2x4x4xf32>
    %15 = vector.shape_cast %11 : vector<2x4xf32> to vector<2x1x4xf32>
    %16 = vector.broadcast %15 : vector<2x1x4xf32> to vector<2x4x4xf32>
    %17 = arith.mulf %14, %16 : vector<2x4x4xf32>
    %c0_4 = arith.constant 0 : index
    %c0_5 = arith.constant 0 : index
    %18 = vector.load %arg5[%c0_4, %c0_5] : memref<1x32xf32, #tpu.memory_space<vmem>>, vector<1x32xf32>
    %c0_6 = arith.constant 0 : index
    %c0_7 = arith.constant 0 : index
    %c0_8 = arith.constant 0 : index
    %19 = vector.load %arg4[%c0_6, %c0_7, %c0_8] : memref<1x4x8xf32, #tpu.memory_space<vmem>>, vector<1x4x8xf32>
    %20 = vector.shape_cast %19 : vector<1x4x8xf32> to vector<4x8xf32>
    %21 = vector.shape_cast %20 : vector<4x8xf32> to vector<1x4x8xf32>
    %22 = vector.broadcast %21 : vector<1x4x8xf32> to vector<2x4x8xf32>
    %c0_9 = arith.constant 0 : index
    %c0_10 = arith.constant 0 : index
    %c0_11 = arith.constant 0 : index
    %c0_12 = arith.constant 0 : index
    %23 = vector.load %arg2[%c0_9, %c0_10, %c0_11, %c0_12] : memref<1x2x4x16xf32, #tpu.memory_space<vmem>>, vector<1x2x4x16xf32>
    %24 = vector.shape_cast %23 : vector<1x2x4x16xf32> to vector<2x4x16xf32>
    "tpu.trace_start"() <{level = 10 : i32, message = "bnm,bmq->bnq"}> : () -> ()
    %cst_13 = arith.constant dense<0.000000e+00> : vector<2x4x16xf32>
    %25 = tpu.matmul %17, %24, %cst_13 {dimension_numbers = #tpu.dot_dimension_numbers<[2], [1], [1], [2], [0, 0, 0, 1, 1, 2], [0], [0]>} : vector<2x4x4xf32>, vector<2x4x16xf32>, vector<2x4x16xf32> -> vector<2x4x16xf32>
    "tpu.trace_stop"() : () -> ()
    %26 = vector.extract_strided_slice %25 {offsets = [0, 0, 0], sizes = [2, 4, 4], strides = [1, 1, 1]} : vector<2x4x16xf32> to vector<2x4x4xf32>
    "tpu.trace_start"() <{level = 10 : i32, message = "bnc,bco->bno"}> : () -> ()
    %cst_14 = arith.constant dense<0.000000e+00> : vector<2x4x8xf32>
    %27 = tpu.matmul %26, %22, %cst_14 {dimension_numbers = #tpu.dot_dimension_numbers<[2], [1], [1], [2], [0, 0, 0, 1, 1, 2], [0], [0]>} : vector<2x4x4xf32>, vector<2x4x8xf32>, vector<2x4x8xf32> -> vector<2x4x8xf32>
    "tpu.trace_stop"() : () -> ()
    %28 = vector.extract_strided_slice %18 {offsets = [0, 0], sizes = [1, 8], strides = [1, 1]} : vector<1x32xf32> to vector<1x8xf32>
    %29 = vector.shape_cast %28 : vector<1x8xf32> to vector<1x1x8xf32>
    %30 = vector.broadcast %29 : vector<1x1x8xf32> to vector<2x4x8xf32>
    %31 = arith.addf %27, %30 : vector<2x4x8xf32>
    %c0_15 = arith.constant 0 : index
    %c0_16 = arith.constant 0 : index
    %c0_17 = arith.constant 0 : index
    %c0_18 = arith.constant 0 : index
    %32 = vector.load %arg6[%c0_15, %c0_16, %c0_17, %c0_18] : memref<2x1x4x32xf32, #tpu.memory_space<vmem>>, vector<2x1x4x8xf32>
    %33 = vector.shape_cast %32 : vector<2x1x4x8xf32> to vector<2x4x8xf32>
    %34 = vector.shape_cast %31 : vector<2x4x8xf32> to vector<2x1x4x8xf32>
    tpu.vector_store %arg6[%c0_15, %c0_16, %c0_17, %c0_18], %34 {strides = array<i32>} : memref<2x1x4x32xf32, #tpu.memory_space<vmem>>, vector<2x1x4x8xf32>,
    %35 = vector.extract_strided_slice %25 {offsets = [0, 0, 4], sizes = [2, 4, 4], strides = [1, 1, 1]} : vector<2x4x16xf32> to vector<2x4x4xf32>
    "tpu.trace_start"() <{level = 10 : i32, message = "bnc,bco->bno"}> : () -> ()
    %cst_19 = arith.constant dense<0.000000e+00> : vector<2x4x8xf32>
    %36 = tpu.matmul %35, %22, %cst_19 {dimension_numbers = #tpu.dot_dimension_numbers<[2], [1], [1], [2], [0, 0, 0, 1, 1, 2], [0], [0]>} : vector<2x4x4xf32>, vector<2x4x8xf32>, vector<2x4x8xf32> -> vector<2x4x8xf32>
    "tpu.trace_stop"() : () -> ()
    %37 = vector.extract_strided_slice %18 {offsets = [0, 8], sizes = [1, 8], strides = [1, 1]} : vector<1x32xf32> to vector<1x8xf32>
    %38 = vector.shape_cast %37 : vector<1x8xf32> to vector<1x1x8xf32>
    %39 = vector.broadcast %38 : vector<1x1x8xf32> to vector<2x4x8xf32>
    %40 = arith.addf %36, %39 : vector<2x4x8xf32>
    %c0_20 = arith.constant 0 : index
    %c0_21 = arith.constant 0 : index
    %c0_22 = arith.constant 0 : index
    %c8 = arith.constant 8 : index
    %41 = vector.load %arg6[%c0_20, %c0_21, %c0_22, %c8] : memref<2x1x4x32xf32, #tpu.memory_space<vmem>>, vector<2x1x4x8xf32>
    %42 = vector.shape_cast %41 : vector<2x1x4x8xf32> to vector<2x4x8xf32>
    %43 = vector.shape_cast %40 : vector<2x4x8xf32> to vector<2x1x4x8xf32>
    tpu.vector_store %arg6[%c0_20, %c0_21, %c0_22, %c8], %43 {strides = array<i32>} : memref<2x1x4x32xf32, #tpu.memory_space<vmem>>, vector<2x1x4x8xf32>,
    %44 = vector.extract_strided_slice %25 {offsets = [0, 0, 8], sizes = [2, 4, 4], strides = [1, 1, 1]} : vector<2x4x16xf32> to vector<2x4x4xf32>
    "tpu.trace_start"() <{level = 10 : i32, message = "bnc,bco->bno"}> : () -> ()
    %cst_23 = arith.constant dense<0.000000e+00> : vector<2x4x8xf32>
    %45 = tpu.matmul %44, %22, %cst_23 {dimension_numbers = #tpu.dot_dimension_numbers<[2], [1], [1], [2], [0, 0, 0, 1, 1, 2], [0], [0]>} : vector<2x4x4xf32>, vector<2x4x8xf32>, vector<2x4x8xf32> -> vector<2x4x8xf32>
    "tpu.trace_stop"() : () -> ()
    %46 = vector.extract_strided_slice %18 {offsets = [0, 16], sizes = [1, 8], strides = [1, 1]} : vector<1x32xf32> to vector<1x8xf32>
    %47 = vector.shape_cast %46 : vector<1x8xf32> to vector<1x1x8xf32>
    %48 = vector.broadcast %47 : vector<1x1x8xf32> to vector<2x4x8xf32>
    %49 = arith.addf %45, %48 : vector<2x4x8xf32>
    %c0_24 = arith.constant 0 : index
    %c0_25 = arith.constant 0 : index
    %c0_26 = arith.constant 0 : index
    %c16 = arith.constant 16 : index
    %50 = vector.load %arg6[%c0_24, %c0_25, %c0_26, %c16] : memref<2x1x4x32xf32, #tpu.memory_space<vmem>>, vector<2x1x4x8xf32>
    %51 = vector.shape_cast %50 : vector<2x1x4x8xf32> to vector<2x4x8xf32>
    %52 = vector.shape_cast %49 : vector<2x4x8xf32> to vector<2x1x4x8xf32>
    tpu.vector_store %arg6[%c0_24, %c0_25, %c0_26, %c16], %52 {strides = array<i32>} : memref<2x1x4x32xf32, #tpu.memory_space<vmem>>, vector<2x1x4x8xf32>,
    %53 = vector.extract_strided_slice %25 {offsets = [0, 0, 12], sizes = [2, 4, 4], strides = [1, 1, 1]} : vector<2x4x16xf32> to vector<2x4x4xf32>
    "tpu.trace_start"() <{level = 10 : i32, message = "bnc,bco->bno"}> : () -> ()
    %cst_27 = arith.constant dense<0.000000e+00> : vector<2x4x8xf32>
    %54 = tpu.matmul %53, %22, %cst_27 {dimension_numbers = #tpu.dot_dimension_numbers<[2], [1], [1], [2], [0, 0, 0, 1, 1, 2], [0], [0]>} : vector<2x4x4xf32>, vector<2x4x8xf32>, vector<2x4x8xf32> -> vector<2x4x8xf32>
    "tpu.trace_stop"() : () -> ()
    %55 = vector.extract_strided_slice %18 {offsets = [0, 24], sizes = [1, 8], strides = [1, 1]} : vector<1x32xf32> to vector<1x8xf32>
    %56 = vector.shape_cast %55 : vector<1x8xf32> to vector<1x1x8xf32>
    %57 = vector.broadcast %56 : vector<1x1x8xf32> to vector<2x4x8xf32>
    %58 = arith.addf %54, %57 : vector<2x4x8xf32>
    %c0_28 = arith.constant 0 : index
    %c0_29 = arith.constant 0 : index
    %c0_30 = arith.constant 0 : index
    %c24 = arith.constant 24 : index
    %59 = vector.load %arg6[%c0_28, %c0_29, %c0_30, %c24] : memref<2x1x4x32xf32, #tpu.memory_space<vmem>>, vector<2x1x4x8xf32>
    %60 = vector.shape_cast %59 : vector<2x1x4x8xf32> to vector<2x4x8xf32>
    %61 = vector.shape_cast %58 : vector<2x4x8xf32> to vector<2x1x4x8xf32>
    tpu.vector_store %arg6[%c0_28, %c0_29, %c0_30, %c24], %61 {strides = array<i32>} : memref<2x1x4x32xf32, #tpu.memory_space<vmem>>, vector<2x1x4x8xf32>,
    return
  }
  func.func @transform_0(%arg0: i32, %arg1: i32) -> (i32, i32, i32, i32) {
    %c0_i32 = arith.constant 0 : i32
    %c0_i32_0 = arith.constant 0 : i32
    %c0_i32_1 = arith.constant 0 : i32
    return %arg0, %arg1, %c0_i32, %c0_i32_0 : i32, i32, i32, i32
  }
  func.func @transform_1(%arg0: i32, %arg1: i32) -> (i32, i32, i32, i32) {
    %c0_i32 = arith.constant 0 : i32
    %c0_i32_0 = arith.constant 0 : i32
    %c0_i32_1 = arith.constant 0 : i32
    return %arg1, %arg0, %c0_i32, %c0_i32_0 : i32, i32, i32, i32
  }
  func.func @transform_2(%arg0: i32, %arg1: i32) -> (i32, i32, i32) {
    %c0_i32 = arith.constant 0 : i32
    %c0_i32_0 = arith.constant 0 : i32
    %c0_i32_1 = arith.constant 0 : i32
    return %arg0, %c0_i32, %c0_i32_0 : i32, i32, i32
  }
  func.func @transform_3(%arg0: i32, %arg1: i32) -> (i32, i32) {
    %c0_i32 = arith.constant 0 : i32
    %c0_i32_0 = arith.constant 0 : i32
    %c0_i32_1 = arith.constant 0 : i32
    return %c0_i32, %c0_i32_0 : i32, i32
  }
  func.func @transform_4(%arg0: i32, %arg1: i32) -> (i32, i32, i32, i32) {
    %c0_i32 = arith.constant 0 : i32
    %c0_i32_0 = arith.constant 0 : i32
    %c0_i32_1 = arith.constant 0 : i32
    return %arg1, %arg0, %c0_i32, %c0_i32_0 : i32, i32, i32, i32
  }
}

</mosaic_0001>

<llo_original>
// kernel: dense_gcn_conv2d_forward.1
$region0: #{dense_gcn_conv2d_forward.1}
  #allocation0 [shape = 'u32[]', space=smem, size = 0x4, offset = 0x4, fixed_abs, tag = 'smem constant byte address 0x4 - core index']
  #allocation1 [shape = 'u32[144,128]{1,0:T(1,128)}', space=vmem, size = 0x12000, scoped, tag = 'internal scratch']
  #allocation2 [shape = 'f32[2,4,32]{2,1,0:T(4,128)}', space=vmem, size = 0x1000, scoped, tag = 'scratch operand']
  %s0 = inlined_call_operand.vmem [shape: f32[4,2,4,16], index: 0, kind: input, shape index: {}]
  %s1 = inlined_call_operand.vmem [shape: f32[2,4,4,4], index: 1, kind: input, shape index: {}]
  %s2 = inlined_call_operand.vmem [shape: f32[4,4,8], index: 2, kind: input, shape index: {}]
  %s3 = inlined_call_operand.vmem [shape: f32[1,32], index: 3, kind: input, shape index: {}]
  %s4 = inlined_call_operand.vmem [shape: f32[2,4,4,32], index: 4, kind: output, shape index: {}]
  %s5 = sld [smem:[#allocation0]]
  $region127: #{dense_gcn_conv2d_forward.1} parent=0
    _
  %s7 = ssub.s32 1, %s5
  %s8 = scalar_select 0, %s7, %s5
  $region1: #{dense_gcn_conv2d_forward.1} parent=0
    #allocation3 [shape = 'u8[8192]{0}', space=vmem, size = 0x2000, scoped, tag = 'input window, operand 1']
    #allocation4 [shape = 'u8[8192]{0}', space=vmem, size = 0x2000, scoped, tag = 'output window, operand 0']
    loop: start=0, step=1, limit=6
    $region2: #{dense_gcn_conv2d_forward.1} parent=1 // loop_pre_header
      _
    $region3: #{dense_gcn_conv2d_forward.1} parent=1 // loop_header
      %s10 = sphi 0, %s14
      %p11 = scmp.ge.s32.totalorder %s10, 6
      %s17 = sphi 0, %s29
      %s18 = sphi 0, %s25
      %s19 = sphi 0, %s17
      %s20 = sphi 0, %s18
      %s21 = sphi 0, %s19
      %s22 = sphi 0, %s20
      %s34 = sphi 0, %s36
      %s37 = sphi 0, %s34
      %s38 = sphi 0, %s37
      %s54 = sphi 0, %s38
      %s62 = sphi 0, %s64
      %s65 = sphi 0, %s62
      %s66 = sphi 0, %s65
      %s82 = sphi 0, %s66
      %s88 = sphi 0, %s90
      %s91 = sphi 0, %s88
      %s92 = sphi 0, %s91
      %s108 = sphi 0, %s92
      %s112 = sphi 0, %s112
      %s114 = sphi 0, %s112
      %s115 = sphi 0, %s114
      %s129 = sphi 0, %s115
      %s137 = sphi 0, %s139
      %s140 = sphi 0, %s137
      %s141 = sphi 0, %s140
      %s157 = sphi 0, %s141
    $region4: #{dense_gcn_conv2d_forward.1} parent=1 // loop_header_branch
      %13 = sbr.rel (%p11) target = $region8
    $region5: #{dense_gcn_conv2d_forward.1} parent=1 // loop_body
      %s15 = ssub.s32 %s10, 1
      %s16 = ssub.s32 %s10, 2
      %s23 = sadd.s32 1, %s18
      %p24 = scmp.ge.s32.totalorder %s23, 1
      %s25 = scalar_select %p24, 0, %s23
      %s26 = sadd.s32 1, %s17
      %s27 = scalar_select %p24, %s26, %s17
      %p28 = scmp.ge.s32.totalorder %s27, 4
      %s29 = scalar_select %p28, 0, %s27
      %s30 = ssub.s32 %s17, %s29
      %s31 = ssub.s32 %s18, %s25
      %s32 = sor.u32 %s30, %s31
      %p33 = scmp.eq.s32.totalorder %s32, 0
      %s35 = sadd.s32 %s34, 1
      %s36 = scalar_select %p33, %s34, %s35
      %p39 = pneg %p33
      %p40 = scmp.eq.s32.totalorder %s10, 3
      %p41 = por %p39, %p40
      %p42 = scmp.ne.s32.totalorder %s34, %s37
      %p43 = scmp.eq.s32.totalorder %s10, 0
      %p44 = por %p42, %p43
      %p45 = scmp.ne.s32.totalorder %s34, %s37
      %p46 = scmp.eq.s32.totalorder %s15, 3
      %p47 = por %p45, %p46
      %p48 = scmp.ne.s32.totalorder %s37, %s38
      %p49 = scmp.eq.s32.totalorder %s15, 0
      %p50 = por %p48, %p49
      %p51 = scmp.ne.s32.totalorder %s37, %s38
      %p52 = scmp.eq.s32.totalorder %s16, 3
      %p53 = por %p51, %p52
      %p55 = scmp.ne.s32.totalorder %s38, %s54
      %p56 = scmp.eq.s32.totalorder %s16, 0
      %p57 = por %p55, %p56
      %s58 = ssub.s32 %s18, %s25
      %s59 = ssub.s32 %s17, %s29
      %s60 = sor.u32 %s58, %s59
      %p61 = scmp.eq.s32.totalorder %s60, 0
      %s63 = sadd.s32 %s62, 1
      %s64 = scalar_select %p61, %s62, %s63
      %p67 = pneg %p61
      %p68 = scmp.eq.s32.totalorder %s10, 3
      %p69 = por %p67, %p68
      %p70 = scmp.ne.s32.totalorder %s62, %s65
      %p71 = scmp.eq.s32.totalorder %s10, 0
      %p72 = por %p70, %p71
      %p73 = scmp.ne.s32.totalorder %s62, %s65
      %p74 = scmp.eq.s32.totalorder %s15, 3
      %p75 = por %p73, %p74
      %p76 = scmp.ne.s32.totalorder %s65, %s66
      %p77 = scmp.eq.s32.totalorder %s15, 0
      %p78 = por %p76, %p77
      %p79 = scmp.ne.s32.totalorder %s65, %s66
      %p80 = scmp.eq.s32.totalorder %s16, 3
      %p81 = por %p79, %p80
      %p83 = scmp.ne.s32.totalorder %s66, %s82
      %p84 = scmp.eq.s32.totalorder %s16, 0
      %p85 = por %p83, %p84
      %s86 = ssub.s32 %s17, %s29
      %p87 = scmp.eq.s32.totalorder %s86, 0
      %s89 = sadd.s32 %s88, 1
      %s90 = scalar_select %p87, %s88, %s89
      %p93 = pneg %p87
      %p94 = scmp.eq.s32.totalorder %s10, 3
      %p95 = por %p93, %p94
      %p96 = scmp.ne.s32.totalorder %s88, %s91
      %p97 = scmp.eq.s32.totalorder %s10, 0
      %p98 = por %p96, %p97
      %p99 = scmp.ne.s32.totalorder %s88, %s91
      %p100 = scmp.eq.s32.totalorder %s15, 3
      %p101 = por %p99, %p100
      %p102 = scmp.ne.s32.totalorder %s91, %s92
      %p103 = scmp.eq.s32.totalorder %s15, 0
      %p104 = por %p102, %p103
      %p105 = scmp.ne.s32.totalorder %s91, %s92
      %p106 = scmp.eq.s32.totalorder %s16, 3
      %p107 = por %p105, %p106
      %p109 = scmp.ne.s32.totalorder %s92, %s108
      %p110 = scmp.eq.s32.totalorder %s16, 0
      %p111 = por %p109, %p110
      %s113 = sadd.s32 %s112, 1
      %p116 = scmp.eq.s32.totalorder %s10, 3
      %p117 = scmp.ne.s32.totalorder %s112, %s114
      %p118 = scmp.eq.s32.totalorder %s10, 0
      %p119 = por %p117, %p118
      %p120 = scmp.ne.s32.totalorder %s112, %s114
      %p121 = scmp.eq.s32.totalorder %s15, 3
      %p122 = por %p120, %p121
      %p123 = scmp.ne.s32.totalorder %s114, %s115
      %p124 = scmp.eq.s32.totalorder %s15, 0
      %p125 = por %p123, %p124
      %p126 = scmp.ne.s32.totalorder %s114, %s115
      %p127 = scmp.eq.s32.totalorder %s16, 3
      %p128 = por %p126, %p127
      %p130 = scmp.ne.s32.totalorder %s115, %s129
      %p131 = scmp.eq.s32.totalorder %s16, 0
      %p132 = por %p130, %p131
      %s133 = ssub.s32 %s18, %s25
      %s134 = ssub.s32 %s17, %s29
      %s135 = sor.u32 %s133, %s134
      %p136 = scmp.eq.s32.totalorder %s135, 0
      %s138 = sadd.s32 %s137, 1
      %s139 = scalar_select %p136, %s137, %s138
      %p142 = pneg %p136
      %p143 = scmp.eq.s32.totalorder %s10, 3
      %p144 = por %p142, %p143
      %p145 = scmp.ne.s32.totalorder %s137, %s140
      %p146 = scmp.eq.s32.totalorder %s10, 0
      %p147 = por %p145, %p146
      %p148 = scmp.ne.s32.totalorder %s137, %s140
      %p149 = scmp.eq.s32.totalorder %s15, 3
      %p150 = por %p148, %p149
      %p151 = scmp.ne.s32.totalorder %s140, %s141
      %p152 = scmp.eq.s32.totalorder %s15, 0
      %p153 = por %p151, %p152
      %p154 = scmp.ne.s32.totalorder %s140, %s141
      %p155 = scmp.eq.s32.totalorder %s16, 3
      %p156 = por %p154, %p155
      %p158 = scmp.ne.s32.totalorder %s141, %s157
      %p159 = scmp.eq.s32.totalorder %s16, 0
      %p160 = por %p158, %p159
      %p161 = scmp.le.s32.totalorder 1, %s10
      %p162 = scmp.lt.s32.totalorder %s10, 5
      %p163 = pnand %p161, %p162
      %p164 = pneg %p163
      // Predicated region
      $region9: #{dense_gcn_conv2d_forward.1} parent=5 // pred_check
        _
      $region10: #{dense_gcn_conv2d_forward.1} parent=5 // pred_check_branch
        %166 = sbr.rel (%p163) target = $region12
      $region11: #{dense_gcn_conv2d_forward.1} parent=5 // pred_region
        %s167 = ssub.s32 %s10, 1
        // Predicated region
        $region13: #{dense_gcn_conv2d_forward.1} parent=11 // pred_check
          %p168 = pneg %p125
        $region14: #{dense_gcn_conv2d_forward.1} parent=11 // pred_check_branch
          %170 = sbr.rel (%p168) target = $region16
        $region15: #{dense_gcn_conv2d_forward.1} parent=11 // pred_region
          _
        $region16: #{dense_gcn_conv2d_forward.1} parent=11 // pred_fallthru
          _
      $region12: #{dense_gcn_conv2d_forward.1} parent=5 // pred_fallthru
        _
      %p171 = scmp.lt.s32.totalorder %s10, 4
      // Predicated region
      $region17: #{dense_gcn_conv2d_forward.1} parent=5 // pred_check
        %p172 = pneg %p171
      $region18: #{dense_gcn_conv2d_forward.1} parent=5 // pred_check_branch
        %174 = sbr.rel (%p172) target = $region20
      $region19: #{dense_gcn_conv2d_forward.1} parent=5 // pred_region
        // Predicated region
        $region21: #{dense_gcn_conv2d_forward.1} parent=19 // pred_check
          %p175 = pneg %p44
        $region22: #{dense_gcn_conv2d_forward.1} parent=19 // pred_check_branch
          %177 = sbr.rel (%p175) target = $region24
        $region23: #{dense_gcn_conv2d_forward.1} parent=19 // pred_region
          %s178 = smul.u32 2, %s18
          %p179 = scmp.lt.s32.totalorder %s17, 3
          %s180 = scalar_select %p179, %s17, 3
          %p181 = scmp.lt.s32.totalorder %s178, 1
          %s182 = scalar_select %p181, %s178, 1
          %s183 = smul.addr %s180, 2
          %s184 = sadd.s32 %s182, %s183
          %s185 = smul.addr %s184, 4
          %s186 = scalar_lea.vmem %s0, %s185
          %s187 = smul.u32 2, %s18
        $region24: #{dense_gcn_conv2d_forward.1} parent=19 // pred_fallthru
          _
        // Predicated region
        $region25: #{dense_gcn_conv2d_forward.1} parent=19 // pred_check
          %p188 = pneg %p72
        $region26: #{dense_gcn_conv2d_forward.1} parent=19 // pred_check_branch
          %190 = sbr.rel (%p188) target = $region28
        $region27: #{dense_gcn_conv2d_forward.1} parent=19 // pred_region
          %s191 = sand.u32 %s62, 1
          %s192 = sand.u32 %s62, 1
          %s193 = smul.addr %s192, 8
          %s194 = scalar_lea.vmem [#allocation3], %s193
          %s195 = smul.u32 2, %s18
          %s196 = smul.addr %s195, 4
          %s197 = sadd.s32 %s17, %s196
          %s198 = smul.addr %s197, 4
          %s199 = scalar_lea.vmem %s1, %s198
          // Predicated region
          $region29: #{dense_gcn_conv2d_forward.1} parent=27 // pred_check
            _
          $region30: #{dense_gcn_conv2d_forward.1} parent=27 // pred_check_branch
            %201 = sbr.rel (0) target = $region32
          $region31: #{dense_gcn_conv2d_forward.1} parent=27 // pred_region
            // Predicated region
            $region33: #{dense_gcn_conv2d_forward.1} parent=31 // pred_check
              _
            $region34: #{dense_gcn_conv2d_forward.1} parent=31 // pred_check_branch
              %203 = sbr.rel target = $region36
            $region35: #{dense_gcn_conv2d_forward.1} parent=31 // pred_region
              // Predicated region
              $region48: #{dense_gcn_conv2d_forward.1} parent=35 // pred_check
                _
              $region49: #{dense_gcn_conv2d_forward.1} parent=35 // pred_check_branch
                %220 = sbr.rel (0) target = $region51
              $region50: #{dense_gcn_conv2d_forward.1} parent=35 // pred_region
                loop: start=0, step=1, limit=1
                $region52: #{dense_gcn_conv2d_forward.1} parent=50 // loop_pre_header
                  _
                $region53: #{dense_gcn_conv2d_forward.1} parent=50 // loop_header
                  %s222 = sphi 0, %s226
                  %p223 = scmp.ge.s32.totalorder %s222, 1
                  %s227 = sphi %s199, %s199
                  %s228 = sphi %s194, %s194
                $region54: #{dense_gcn_conv2d_forward.1} parent=50 // loop_header_branch
                  %225 = sbr.rel (%p223) target = $region58
                $region55: #{dense_gcn_conv2d_forward.1} parent=50 // loop_body
                  _
                $region56: #{dense_gcn_conv2d_forward.1} parent=50 // loop_footer
                  %s226 = sadd.s32 1, %s222
                $region57: #{dense_gcn_conv2d_forward.1} parent=50 // loop_footer_branch
                  %221 = sbr.rel target = $region53
                $region58: #{dense_gcn_conv2d_forward.1} parent=50 // loop_exit
                  _
                loop: start=0, step=1, limit=1
                $region59: #{dense_gcn_conv2d_forward.1} parent=50 // loop_pre_header
                  _
                $region60: #{dense_gcn_conv2d_forward.1} parent=50 // loop_header
                  %s231 = sphi 0, %s235
                  %p232 = scmp.ge.s32.totalorder %s231, 1
                  %s236 = sphi %s199, %s199
                  %s237 = sphi %s194, %s194
                $region61: #{dense_gcn_conv2d_forward.1} parent=50 // loop_header_branch
                  %234 = sbr.rel (%p232) target = $region65
                $region62: #{dense_gcn_conv2d_forward.1} parent=50 // loop_body
                  %v238 = vld [vmem:[%s236] sm:$0xf]
                  %239 = vst [vmem:[%s237] sm:$0xf] %v238
                  %v240 = vld [vmem:[%s236 + $0x10] sm:$0xf]
                  %241 = vst [vmem:[%s237 + $0x4] sm:$0xf] %v240
                $region63: #{dense_gcn_conv2d_forward.1} parent=50 // loop_footer
                  %s235 = sadd.s32 1, %s231
                $region64: #{dense_gcn_conv2d_forward.1} parent=50 // loop_footer_branch
                  %230 = sbr.rel target = $region60
                $region65: #{dense_gcn_conv2d_forward.1} parent=50 // loop_exit
                  _
              $region51: #{dense_gcn_conv2d_forward.1} parent=35 // pred_fallthru
                _
            $region36: #{dense_gcn_conv2d_forward.1} parent=31 // pred_fallthru
              _
            // Predicated region
            $region37: #{dense_gcn_conv2d_forward.1} parent=31 // pred_check
              _
            $region38: #{dense_gcn_conv2d_forward.1} parent=31 // pred_check_branch
              %205 = sbr.rel (0) target = $region40
            $region39: #{dense_gcn_conv2d_forward.1} parent=31 // pred_region
              loop: start=0, step=1, limit=1
              $region41: #{dense_gcn_conv2d_forward.1} parent=39 // loop_pre_header
                _
              $region42: #{dense_gcn_conv2d_forward.1} parent=39 // loop_header
                %s208 = sphi 0, %s212
                %p209 = scmp.ge.s32.totalorder %s208, 1
                %s213 = sphi %s199, %s199
                %s214 = sphi %s194, %s194
              $region43: #{dense_gcn_conv2d_forward.1} parent=39 // loop_header_branch
                %211 = sbr.rel (%p209) target = $region47
              $region44: #{dense_gcn_conv2d_forward.1} parent=39 // loop_body
                %v215 = vld [vmem:[%s213] sm:$0xf]
                %216 = vst [vmem:[%s214] sm:$0xf] %v215
                %v217 = vld [vmem:[%s213 + $0x10] sm:$0xf]
                %218 = vst [vmem:[%s214 + $0x4] sm:$0xf] %v217
              $region45: #{dense_gcn_conv2d_forward.1} parent=39 // loop_footer
                %s212 = sadd.s32 1, %s208
              $region46: #{dense_gcn_conv2d_forward.1} parent=39 // loop_footer_branch
                %207 = sbr.rel target = $region42
              $region47: #{dense_gcn_conv2d_forward.1} parent=39 // loop_exit
                _
            $region40: #{dense_gcn_conv2d_forward.1} parent=31 // pred_fallthru
              _
          $region32: #{dense_gcn_conv2d_forward.1} parent=27 // pred_fallthru
            _
          %242 = vnop
        $region28: #{dense_gcn_conv2d_forward.1} parent=19 // pred_fallthru
          _
        // Predicated region
        $region66: #{dense_gcn_conv2d_forward.1} parent=19 // pred_check
          %p243 = pneg %p98
        $region67: #{dense_gcn_conv2d_forward.1} parent=19 // pred_check_branch
          %245 = sbr.rel (%p243) target = $region69
        $region68: #{dense_gcn_conv2d_forward.1} parent=19 // pred_region
          %p246 = scmp.lt.s32.totalorder %s17, 3
          %s247 = scalar_select %p246, %s17, 3
          %s248 = smul.addr %s247, 4
          %s249 = scalar_lea.vmem %s2, %s248
        $region69: #{dense_gcn_conv2d_forward.1} parent=19 // pred_fallthru
          _
      $region20: #{dense_gcn_conv2d_forward.1} parent=5 // pred_fallthru
        _
      %p250 = scmp.le.s32.totalorder 1, %s10
      %p251 = scmp.lt.s32.totalorder %s10, 5
      %p252 = pnand %p250, %p251
      %p253 = pneg %p252
      // Predicated region
      $region70: #{dense_gcn_conv2d_forward.1} parent=5 // pred_check
        _
      $region71: #{dense_gcn_conv2d_forward.1} parent=5 // pred_check_branch
        %255 = sbr.rel (%p252) target = $region73
      $region72: #{dense_gcn_conv2d_forward.1} parent=5 // pred_region
        %s256 = ssub.s32 %s10, 1
        %s257 = sand.u32 %s65, 1
        %s258 = sand.u32 %s65, 1
        %s259 = smul.addr %s258, 8
        %s260 = scalar_lea.vmem [#allocation3], %s259
        // Predicated region
        $region74: #{dense_gcn_conv2d_forward.1} parent=72 // pred_check
          %p261 = pneg %p78
        $region75: #{dense_gcn_conv2d_forward.1} parent=72 // pred_check_branch
          %263 = sbr.rel (%p261) target = $region77
        $region76: #{dense_gcn_conv2d_forward.1} parent=72 // pred_region
          _
        $region77: #{dense_gcn_conv2d_forward.1} parent=72 // pred_fallthru
          _
        %s264 = smul.u32 2, %s20
        %p265 = scmp.lt.s32.totalorder %s19, 3
        %s266 = scalar_select %p265, %s19, 3
        %p267 = scmp.lt.s32.totalorder %s264, 1
        %s268 = scalar_select %p267, %s264, 1
        %s269 = smul.addr %s266, 2
        %s270 = sadd.s32 %s268, %s269
        %s271 = smul.addr %s270, 4
        %s272 = scalar_lea.vmem %s0, %s271
        %p273 = pneg %p50
        %p274 = pneg %p47
        %s275 = sand.u32 %s65, 1
        %s276 = sand.u32 %s65, 1
        %s277 = smul.addr %s276, 8
        %s278 = scalar_lea.vmem [#allocation3], %s277
        %p279 = pneg %p78
        %p280 = pneg %p75
        %p281 = scmp.lt.s32.totalorder %s19, 3
        %s282 = scalar_select %p281, %s19, 3
        %s283 = smul.addr %s282, 4
        %s284 = scalar_lea.vmem %s2, %s283
        %p285 = pneg %p104
        %p286 = pneg %p101
        %p287 = pneg %p125
        %p288 = pneg %p122
        %p289 = pneg %p153
        %p290 = pneg %p150
        %s291 = sand.u32 %s140, 1
        %s292 = sand.u32 %s140, 1
        %s293 = smul.addr %s292, 8
        %s294 = scalar_lea.vmem [#allocation4], %s293
        %s295 = smul.u32 2, %s20
        %p296 = scmp.lt.s32.totalorder %s19, 3
        %s297 = scalar_select %p296, %s19, 3
        %p298 = scmp.lt.s32.totalorder %s295, 1
        %s299 = scalar_select %p298, %s295, 1
        %s300 = smul.addr %s297, 2
        %s301 = sadd.s32 %s299, %s300
        %s302 = smul.addr %s301, 4
        %s303 = scalar_lea.vmem %s0, %s302
        %s304 = smul.u32 2, %s20
        %s305 = smul.u32 2, %s20
        %p306 = scmp.lt.s32.totalorder %s19, 3
        %s307 = scalar_select %p306, %s19, 3
        %s308 = smul.addr %s307, 4
        %s309 = scalar_lea.vmem %s2, %s308
        %s310 = smul.u32 2, %s20
        %v311 = vld [vmem:[%s260] sm:$0xf]
        %v312 = vld [vmem:[%s260 + $0x4] sm:$0xf]
        %v313 = vlaneseq
        %v314 = vshrl.u32 %v313, 7
        %v315 = vstv %s19
        %vm316 = vcmp.eq.s32.totalorder %v314, %v315
        %v317 = vsel %vm316, 1, 0
        %v318 = vcvt.s32.f32 %v317
        %v319 = vadd.f32 %v311, %v318
        %v320 = vadd.f32 %v312, %v318
        %vm321 = vcmask 27648
        %v322 = vsel %vm321, %v319, 0.0
        %323 = vadd.xlane.f32.xlu0 %v322
        %v324 = vpop.xlane.xlu0 %323
        %v325 = vsel %vm321, %v320, 0.0
        %326 = vadd.xlane.f32.xlu0 %v325
        %v327 = vpop.xlane.xlu0 %326
        %v328 = vmax.f32 %v324, 1.0
        %v329 = vmax.f32 %v327, 1.0
        %v330 = vrsqrt.pop %v328
        %v331 = vrsqrt.pop %v329
        %v332 = vmul.f32 %v330, %v319
        %v333 = vmul.f32 %v331, %v320
        %v336 = vlaneseq
        %v337 = vand.u32 %v336, 127
        %v338 = vlaneseq
        %v339 = vshrl.u32 %v338, 7
        %v340 = vsub.s32 %v337, %v339
        %v341 = vrot.slane %v330, %v340
        %v342 = vlaneseq
        %v343 = vshrl.u32 %v342, 7
        %v344 = vsub.s32 %v337, %v343
        %v345 = vrot.slane %v331, %v344
        %vm346 = vcmask 1042434
        %v347 = vsel %vm346, %v341, %v341
        %vm348 = vcmask 1043459
        %v349 = vsel %vm348, %v341, %v347
        %v350 = vsel %vm346, %v345, %v345
        %v351 = vsel %vm348, %v345, %v350
        %v354 = vmul.f32 %v332, %v349
        %v355 = vmul.f32 %v333, %v351
        %v356 = vld [vmem:[%s3] sm:$0x1]
        %v357 = vld [vmem:[%s309] sm:$0xf]
        %v358 = vld [vmem:[%s303] sm:$0xf]
        %v359 = vld [vmem:[%s303 + $0x4] sm:$0xf]
        %vm360 = vcmask 31744
        %v362 = vsel %vm360, %v354, 0
        %vm364 = vcmask 1043456
        %v366 = vsel %vm364, %v358, 0
        %368 = vmatprep.subr.mxu0 0.0
        %369 = vmatpush1.msra.mxu0 %v366
        %370 = vmatprep.subr.mxu0 0.0
        %371 = vmatpush1.msra.mxu0 0.0
        %372 = vmatprep.subr.mxu0 0.0
        %373 = vmatpush1.msra.mxu0 0.0
        %374 = vmatprep.subr.mxu0 0.0
        %375 = vmatpush1.msra.mxu0 0.0
        %376 = vmatprep.subr.mxu0 0.0
        %377 = vmatpush1.msra.mxu0 0.0
        %378 = vmatprep.subr.mxu0 0.0
        %379 = vmatpush1.msra.mxu0 0.0
        %380 = vmatprep.subr.mxu0 0.0
        %381 = vmatpush1.msra.mxu0 0.0
        %382 = vmatprep.subr.mxu0 0.0
        %383 = vmatpush1.msra.mxu0 0.0
        %384 = vmatprep.subr.mxu0 0.0
        %385 = vmatpush1.msra.mxu0 0.0
        %386 = vmatprep.subr.mxu0 0.0
        %387 = vmatpush1.msra.mxu0 0.0
        %388 = vmatprep.subr.mxu0 0.0
        %389 = vmatpush1.msra.mxu0 0.0
        %390 = vmatprep.subr.mxu0 0.0
        %391 = vmatpush1.msra.mxu0 0.0
        %392 = vmatprep.subr.mxu0 0.0
        %393 = vmatpush1.msra.mxu0 0.0
        %394 = vmatprep.subr.mxu0 0.0
        %395 = vmatpush1.msra.mxu0 0.0
        %396 = vmatprep.subr.mxu0 0.0
        %397 = vmatpush1.msra.mxu0 0.0
        %398 = vmatprep.subr.mxu0 0.0
        %399 = vmatpush1.msra.mxu0 0.0
        %400 = vmatprep.subr.mxu0 0.0
        %401 = vmatpush1.msra.mxu0 0.0
        %402 = vmatprep.subr.mxu0 0.0
        %403 = vmatpush1.msra.mxu0 0.0
        %404 = vmatprep.subr.mxu0 0.0
        %405 = vmatpush1.msra.mxu0 0.0
        %406 = vmatprep.subr.mxu0 0.0
        %407 = vmatpush1.msra.mxu0 0.0
        %408 = vmatprep.subr.mxu0 0.0
        %409 = vmatpush1.msra.mxu0 0.0
        %410 = vmatprep.subr.mxu0 0.0
        %411 = vmatpush1.msra.mxu0 0.0
        %412 = vmatprep.subr.mxu0 0.0
        %413 = vmatpush1.msra.mxu0 0.0
        %414 = vmatprep.subr.mxu0 0.0
        %415 = vmatpush1.msra.mxu0 0.0
        %416 = vmatprep.subr.mxu0 0.0
        %417 = vmatpush1.msra.mxu0 0.0
        %418 = vmatprep.subr.mxu0 0.0
        %419 = vmatpush1.msra.mxu0 0.0
        %420 = vmatprep.subr.mxu0 0.0
        %421 = vmatpush1.msra.mxu0 0.0
        %422 = vmatprep.subr.mxu0 0.0
        %423 = vmatpush1.msra.mxu0 0.0
        %424 = vmatprep.subr.mxu0 0.0
        %425 = vmatpush1.msra.mxu0 0.0
        %426 = vmatprep.subr.mxu0 0.0
        %427 = vmatpush1.msra.mxu0 0.0
        %428 = vmatprep.subr.mxu0 0.0
        %429 = vmatpush1.msra.mxu0 0.0
        %430 = vmatprep.subr.mxu0 0.0
        %431 = vmatpush1.msra.mxu0 0.0
        %432 = vmatprep.mubr.f32.mxu0 0.0
        %433 = vmatmul.mubr.f32.gmra.mrb[0].mxu0 %v362
        %v434 = vpop.f32.mrb[0].mxu0
        %v435 = vadd.f32 0.0, %v434
        %v436 = vpop.f32.mrb[0].mxu0
        %437 = vdwg.mxu0
        %v439 = vsel %vm360, %v355, 0
        %v442 = vsel %vm364, %v359, 0
        %444 = vmatprep.subr.mxu0 0.0
        %445 = vmatpush1.msra.mxu0 %v442
        %446 = vmatprep.subr.mxu0 0.0
        %447 = vmatpush1.msra.mxu0 0.0
        %448 = vmatprep.subr.mxu0 0.0
        %449 = vmatpush1.msra.mxu0 0.0
        %450 = vmatprep.subr.mxu0 0.0
        %451 = vmatpush1.msra.mxu0 0.0
        %452 = vmatprep.subr.mxu0 0.0
        %453 = vmatpush1.msra.mxu0 0.0
        %454 = vmatprep.subr.mxu0 0.0
        %455 = vmatpush1.msra.mxu0 0.0
        %456 = vmatprep.subr.mxu0 0.0
        %457 = vmatpush1.msra.mxu0 0.0
        %458 = vmatprep.subr.mxu0 0.0
        %459 = vmatpush1.msra.mxu0 0.0
        %460 = vmatprep.subr.mxu0 0.0
        %461 = vmatpush1.msra.mxu0 0.0
        %462 = vmatprep.subr.mxu0 0.0
        %463 = vmatpush1.msra.mxu0 0.0
        %464 = vmatprep.subr.mxu0 0.0
        %465 = vmatpush1.msra.mxu0 0.0
        %466 = vmatprep.subr.mxu0 0.0
        %467 = vmatpush1.msra.mxu0 0.0
        %468 = vmatprep.subr.mxu0 0.0
        %469 = vmatpush1.msra.mxu0 0.0
        %470 = vmatprep.subr.mxu0 0.0
        %471 = vmatpush1.msra.mxu0 0.0
        %472 = vmatprep.subr.mxu0 0.0
        %473 = vmatpush1.msra.mxu0 0.0
        %474 = vmatprep.subr.mxu0 0.0
        %475 = vmatpush1.msra.mxu0 0.0
        %476 = vmatprep.subr.mxu0 0.0
        %477 = vmatpush1.msra.mxu0 0.0
        %478 = vmatprep.subr.mxu0 0.0
        %479 = vmatpush1.msra.mxu0 0.0
        %480 = vmatprep.subr.mxu0 0.0
        %481 = vmatpush1.msra.mxu0 0.0
        %482 = vmatprep.subr.mxu0 0.0
        %483 = vmatpush1.msra.mxu0 0.0
        %484 = vmatprep.subr.mxu0 0.0
        %485 = vmatpush1.msra.mxu0 0.0
        %486 = vmatprep.subr.mxu0 0.0
        %487 = vmatpush1.msra.mxu0 0.0
        %488 = vmatprep.subr.mxu0 0.0
        %489 = vmatpush1.msra.mxu0 0.0
        %490 = vmatprep.subr.mxu0 0.0
        %491 = vmatpush1.msra.mxu0 0.0
        %492 = vmatprep.subr.mxu0 0.0
        %493 = vmatpush1.msra.mxu0 0.0
        %494 = vmatprep.subr.mxu0 0.0
        %495 = vmatpush1.msra.mxu0 0.0
        %496 = vmatprep.subr.mxu0 0.0
        %497 = vmatpush1.msra.mxu0 0.0
        %498 = vmatprep.subr.mxu0 0.0
        %499 = vmatpush1.msra.mxu0 0.0
        %500 = vmatprep.subr.mxu0 0.0
        %501 = vmatpush1.msra.mxu0 0.0
        %502 = vmatprep.subr.mxu0 0.0
        %503 = vmatpush1.msra.mxu0 0.0
        %504 = vmatprep.subr.mxu0 0.0
        %505 = vmatpush1.msra.mxu0 0.0
        %506 = vmatprep.subr.mxu0 0.0
        %507 = vmatpush1.msra.mxu0 0.0
        %508 = vmatprep.mubr.f32.mxu0 0.0
        %509 = vmatmul.mubr.f32.gmra.mrb[0].mxu0 %v439
        %v510 = vpop.f32.mrb[0].mxu0
        %v511 = vadd.f32 0.0, %v510
        %v512 = vpop.f32.mrb[0].mxu0
        %513 = vdwg.mxu0
        %v515 = vlaneseq
        %v516 = vshrl.u32 %v515, 7
        %v517 = vsub.s32 0, %v516
        %v518 = vrot.slane %v356, %v517
        %v521 = vsel %vm360, %v435, 0
        %v524 = vsel %vm364, %v357, 0
        %526 = vmatprep.subr.mxu0 0.0
        %527 = vmatpush1.msra.mxu0 %v524
        %528 = vmatprep.subr.mxu0 0.0
        %529 = vmatpush1.msra.mxu0 0.0
        %530 = vmatprep.subr.mxu0 0.0
        %531 = vmatpush1.msra.mxu0 0.0
        %532 = vmatprep.subr.mxu0 0.0
        %533 = vmatpush1.msra.mxu0 0.0
        %534 = vmatprep.subr.mxu0 0.0
        %535 = vmatpush1.msra.mxu0 0.0
        %536 = vmatprep.subr.mxu0 0.0
        %537 = vmatpush1.msra.mxu0 0.0
        %538 = vmatprep.subr.mxu0 0.0
        %539 = vmatpush1.msra.mxu0 0.0
        %540 = vmatprep.subr.mxu0 0.0
        %541 = vmatpush1.msra.mxu0 0.0
        %542 = vmatprep.subr.mxu0 0.0
        %543 = vmatpush1.msra.mxu0 0.0
        %544 = vmatprep.subr.mxu0 0.0
        %545 = vmatpush1.msra.mxu0 0.0
        %546 = vmatprep.subr.mxu0 0.0
        %547 = vmatpush1.msra.mxu0 0.0
        %548 = vmatprep.subr.mxu0 0.0
        %549 = vmatpush1.msra.mxu0 0.0
        %550 = vmatprep.subr.mxu0 0.0
        %551 = vmatpush1.msra.mxu0 0.0
        %552 = vmatprep.subr.mxu0 0.0
        %553 = vmatpush1.msra.mxu0 0.0
        %554 = vmatprep.subr.mxu0 0.0
        %555 = vmatpush1.msra.mxu0 0.0
        %556 = vmatprep.subr.mxu0 0.0
        %557 = vmatpush1.msra.mxu0 0.0
        %558 = vmatprep.subr.mxu0 0.0
        %559 = vmatpush1.msra.mxu0 0.0
        %560 = vmatprep.subr.mxu0 0.0
        %561 = vmatpush1.msra.mxu0 0.0
        %562 = vmatprep.subr.mxu0 0.0
        %563 = vmatpush1.msra.mxu0 0.0
        %564 = vmatprep.subr.mxu0 0.0
        %565 = vmatpush1.msra.mxu0 0.0
        %566 = vmatprep.subr.mxu0 0.0
        %567 = vmatpush1.msra.mxu0 0.0
        %568 = vmatprep.subr.mxu0 0.0
        %569 = vmatpush1.msra.mxu0 0.0
        %570 = vmatprep.subr.mxu0 0.0
        %571 = vmatpush1.msra.mxu0 0.0
        %572 = vmatprep.subr.mxu0 0.0
        %573 = vmatpush1.msra.mxu0 0.0
        %574 = vmatprep.subr.mxu0 0.0
        %575 = vmatpush1.msra.mxu0 0.0
        %576 = vmatprep.subr.mxu0 0.0
        %577 = vmatpush1.msra.mxu0 0.0
        %578 = vmatprep.subr.mxu0 0.0
        %579 = vmatpush1.msra.mxu0 0.0
        %580 = vmatprep.subr.mxu0 0.0
        %581 = vmatpush1.msra.mxu0 0.0
        %582 = vmatprep.subr.mxu0 0.0
        %583 = vmatpush1.msra.mxu0 0.0
        %584 = vmatprep.subr.mxu0 0.0
        %585 = vmatpush1.msra.mxu0 0.0
        %586 = vmatprep.subr.mxu0 0.0
        %587 = vmatpush1.msra.mxu0 0.0
        %588 = vmatprep.subr.mxu0 0.0
        %589 = vmatpush1.msra.mxu0 0.0
        %590 = vmatprep.mubr.f32.mxu0 0.0
        %591 = vmatmul.mubr.f32.gmra.mrb[0].mxu0 %v521
        %v592 = vpop.f32.mrb[0].mxu0
        %v593 = vadd.f32 %v518, %v592
        %v594 = vpop.f32.mrb[0].mxu0
        %595 = vdwg.mxu0
        %v597 = vsel %vm360, %v511, 0
        %599 = vmatprep.subr.mxu0 0.0
        %600 = vmatpush1.msra.mxu0 %v524
        %601 = vmatprep.subr.mxu0 0.0
        %602 = vmatpush1.msra.mxu0 0.0
        %603 = vmatprep.subr.mxu0 0.0
        %604 = vmatpush1.msra.mxu0 0.0
        %605 = vmatprep.subr.mxu0 0.0
        %606 = vmatpush1.msra.mxu0 0.0
        %607 = vmatprep.subr.mxu0 0.0
        %608 = vmatpush1.msra.mxu0 0.0
        %609 = vmatprep.subr.mxu0 0.0
        %610 = vmatpush1.msra.mxu0 0.0
        %611 = vmatprep.subr.mxu0 0.0
        %612 = vmatpush1.msra.mxu0 0.0
        %613 = vmatprep.subr.mxu0 0.0
        %614 = vmatpush1.msra.mxu0 0.0
        %615 = vmatprep.subr.mxu0 0.0
        %616 = vmatpush1.msra.mxu0 0.0
        %617 = vmatprep.subr.mxu0 0.0
        %618 = vmatpush1.msra.mxu0 0.0
        %619 = vmatprep.subr.mxu0 0.0
        %620 = vmatpush1.msra.mxu0 0.0
        %621 = vmatprep.subr.mxu0 0.0
        %622 = vmatpush1.msra.mxu0 0.0
        %623 = vmatprep.subr.mxu0 0.0
        %624 = vmatpush1.msra.mxu0 0.0
        %625 = vmatprep.subr.mxu0 0.0
        %626 = vmatpush1.msra.mxu0 0.0
        %627 = vmatprep.subr.mxu0 0.0
        %628 = vmatpush1.msra.mxu0 0.0
        %629 = vmatprep.subr.mxu0 0.0
        %630 = vmatpush1.msra.mxu0 0.0
        %631 = vmatprep.subr.mxu0 0.0
        %632 = vmatpush1.msra.mxu0 0.0
        %633 = vmatprep.subr.mxu0 0.0
        %634 = vmatpush1.msra.mxu0 0.0
        %635 = vmatprep.subr.mxu0 0.0
        %636 = vmatpush1.msra.mxu0 0.0
        %637 = vmatprep.subr.mxu0 0.0
        %638 = vmatpush1.msra.mxu0 0.0
        %639 = vmatprep.subr.mxu0 0.0
        %640 = vmatpush1.msra.mxu0 0.0
        %641 = vmatprep.subr.mxu0 0.0
        %642 = vmatpush1.msra.mxu0 0.0
        %643 = vmatprep.subr.mxu0 0.0
        %644 = vmatpush1.msra.mxu0 0.0
        %645 = vmatprep.subr.mxu0 0.0
        %646 = vmatpush1.msra.mxu0 0.0
        %647 = vmatprep.subr.mxu0 0.0
        %648 = vmatpush1.msra.mxu0 0.0
        %649 = vmatprep.subr.mxu0 0.0
        %650 = vmatpush1.msra.mxu0 0.0
        %651 = vmatprep.subr.mxu0 0.0
        %652 = vmatpush1.msra.mxu0 0.0
        %653 = vmatprep.subr.mxu0 0.0
        %654 = vmatpush1.msra.mxu0 0.0
        %655 = vmatprep.subr.mxu0 0.0
        %656 = vmatpush1.msra.mxu0 0.0
        %657 = vmatprep.subr.mxu0 0.0
        %658 = vmatpush1.msra.mxu0 0.0
        %659 = vmatprep.subr.mxu0 0.0
        %660 = vmatpush1.msra.mxu0 0.0
        %661 = vmatprep.subr.mxu0 0.0
        %662 = vmatpush1.msra.mxu0 0.0
        %663 = vmatprep.mubr.f32.mxu0 0.0
        %664 = vmatmul.mubr.f32.gmra.mrb[0].mxu0 %v597
        %v665 = vpop.f32.mrb[0].mxu0
        %v666 = vadd.f32 %v518, %v665
        %v667 = vpop.f32.mrb[0].mxu0
        %668 = vdwg.mxu0
        %vm669 = vcmask 60416
        %670 = vst.msk [vmem:[%s294] sm:$0xf] %vm669, %v593
        %671 = vst.msk [vmem:[%s294 + $0x4] sm:$0xf] %vm669, %v666
        %672 = vrot.lane.b32.xlu0 %v435, 124
        %v673 = vpop.permute.xlu0 %672
        %674 = vrot.lane.b32.xlu0 %v518, 120
        %v675 = vpop.permute.xlu0 %674
        %v677 = vsel %vm360, %v673, 0
        %679 = vmatprep.subr.mxu0 0.0
        %680 = vmatpush1.msra.mxu0 %v524
        %681 = vmatprep.subr.mxu0 0.0
        %682 = vmatpush1.msra.mxu0 0.0
        %683 = vmatprep.subr.mxu0 0.0
        %684 = vmatpush1.msra.mxu0 0.0
        %685 = vmatprep.subr.mxu0 0.0
        %686 = vmatpush1.msra.mxu0 0.0
        %687 = vmatprep.subr.mxu0 0.0
        %688 = vmatpush1.msra.mxu0 0.0
        %689 = vmatprep.subr.mxu0 0.0
        %690 = vmatpush1.msra.mxu0 0.0
        %691 = vmatprep.subr.mxu0 0.0
        %692 = vmatpush1.msra.mxu0 0.0
        %693 = vmatprep.subr.mxu0 0.0
        %694 = vmatpush1.msra.mxu0 0.0
        %695 = vmatprep.subr.mxu0 0.0
        %696 = vmatpush1.msra.mxu0 0.0
        %697 = vmatprep.subr.mxu0 0.0
        %698 = vmatpush1.msra.mxu0 0.0
        %699 = vmatprep.subr.mxu0 0.0
        %700 = vmatpush1.msra.mxu0 0.0
        %701 = vmatprep.subr.mxu0 0.0
        %702 = vmatpush1.msra.mxu0 0.0
        %703 = vmatprep.subr.mxu0 0.0
        %704 = vmatpush1.msra.mxu0 0.0
        %705 = vmatprep.subr.mxu0 0.0
        %706 = vmatpush1.msra.mxu0 0.0
        %707 = vmatprep.subr.mxu0 0.0
        %708 = vmatpush1.msra.mxu0 0.0
        %709 = vmatprep.subr.mxu0 0.0
        %710 = vmatpush1.msra.mxu0 0.0
        %711 = vmatprep.subr.mxu0 0.0
        %712 = vmatpush1.msra.mxu0 0.0
        %713 = vmatprep.subr.mxu0 0.0
        %714 = vmatpush1.msra.mxu0 0.0
        %715 = vmatprep.subr.mxu0 0.0
        %716 = vmatpush1.msra.mxu0 0.0
        %717 = vmatprep.subr.mxu0 0.0
        %718 = vmatpush1.msra.mxu0 0.0
        %719 = vmatprep.subr.mxu0 0.0
        %720 = vmatpush1.msra.mxu0 0.0
        %721 = vmatprep.subr.mxu0 0.0
        %722 = vmatpush1.msra.mxu0 0.0
        %723 = vmatprep.subr.mxu0 0.0
        %724 = vmatpush1.msra.mxu0 0.0
        %725 = vmatprep.subr.mxu0 0.0
        %726 = vmatpush1.msra.mxu0 0.0
        %727 = vmatprep.subr.mxu0 0.0
        %728 = vmatpush1.msra.mxu0 0.0
        %729 = vmatprep.subr.mxu0 0.0
        %730 = vmatpush1.msra.mxu0 0.0
        %731 = vmatprep.subr.mxu0 0.0
        %732 = vmatpush1.msra.mxu0 0.0
        %733 = vmatprep.subr.mxu0 0.0
        %734 = vmatpush1.msra.mxu0 0.0
        %735 = vmatprep.subr.mxu0 0.0
        %736 = vmatpush1.msra.mxu0 0.0
        %737 = vmatprep.subr.mxu0 0.0
        %738 = vmatpush1.msra.mxu0 0.0
        %739 = vmatprep.subr.mxu0 0.0
        %740 = vmatpush1.msra.mxu0 0.0
        %741 = vmatprep.subr.mxu0 0.0
        %742 = vmatpush1.msra.mxu0 0.0
        %743 = vmatprep.mubr.f32.mxu0 0.0
        %744 = vmatmul.mubr.f32.gmra.mrb[0].mxu0 %v677
        %v745 = vpop.f32.mrb[0].mxu0
        %v746 = vadd.f32 %v675, %v745
        %v747 = vpop.f32.mrb[0].mxu0
        %748 = vdwg.mxu0
        %749 = vrot.lane.b32.xlu0 %v511, 124
        %v750 = vpop.permute.xlu0 %749
        %v751 = vsel %vm360, %v750, 0
        %753 = vmatprep.subr.mxu0 0.0
        %754 = vmatpush1.msra.mxu0 %v524
        %755 = vmatprep.subr.mxu0 0.0
        %756 = vmatpush1.msra.mxu0 0.0
        %757 = vmatprep.subr.mxu0 0.0
        %758 = vmatpush1.msra.mxu0 0.0
        %759 = vmatprep.subr.mxu0 0.0
        %760 = vmatpush1.msra.mxu0 0.0
        %761 = vmatprep.subr.mxu0 0.0
        %762 = vmatpush1.msra.mxu0 0.0
        %763 = vmatprep.subr.mxu0 0.0
        %764 = vmatpush1.msra.mxu0 0.0
        %765 = vmatprep.subr.mxu0 0.0
        %766 = vmatpush1.msra.mxu0 0.0
        %767 = vmatprep.subr.mxu0 0.0
        %768 = vmatpush1.msra.mxu0 0.0
        %769 = vmatprep.subr.mxu0 0.0
        %770 = vmatpush1.msra.mxu0 0.0
        %771 = vmatprep.subr.mxu0 0.0
        %772 = vmatpush1.msra.mxu0 0.0
        %773 = vmatprep.subr.mxu0 0.0
        %774 = vmatpush1.msra.mxu0 0.0
        %775 = vmatprep.subr.mxu0 0.0
        %776 = vmatpush1.msra.mxu0 0.0
        %777 = vmatprep.subr.mxu0 0.0
        %778 = vmatpush1.msra.mxu0 0.0
        %779 = vmatprep.subr.mxu0 0.0
        %780 = vmatpush1.msra.mxu0 0.0
        %781 = vmatprep.subr.mxu0 0.0
        %782 = vmatpush1.msra.mxu0 0.0
        %783 = vmatprep.subr.mxu0 0.0
        %784 = vmatpush1.msra.mxu0 0.0
        %785 = vmatprep.subr.mxu0 0.0
        %786 = vmatpush1.msra.mxu0 0.0
        %787 = vmatprep.subr.mxu0 0.0
        %788 = vmatpush1.msra.mxu0 0.0
        %789 = vmatprep.subr.mxu0 0.0
        %790 = vmatpush1.msra.mxu0 0.0
        %791 = vmatprep.subr.mxu0 0.0
        %792 = vmatpush1.msra.mxu0 0.0
        %793 = vmatprep.subr.mxu0 0.0
        %794 = vmatpush1.msra.mxu0 0.0
        %795 = vmatprep.subr.mxu0 0.0
        %796 = vmatpush1.msra.mxu0 0.0
        %797 = vmatprep.subr.mxu0 0.0
        %798 = vmatpush1.msra.mxu0 0.0
        %799 = vmatprep.subr.mxu0 0.0
        %800 = vmatpush1.msra.mxu0 0.0
        %801 = vmatprep.subr.mxu0 0.0
        %802 = vmatpush1.msra.mxu0 0.0
        %803 = vmatprep.subr.mxu0 0.0
        %804 = vmatpush1.msra.mxu0 0.0
        %805 = vmatprep.subr.mxu0 0.0
        %806 = vmatpush1.msra.mxu0 0.0
        %807 = vmatprep.subr.mxu0 0.0
        %808 = vmatpush1.msra.mxu0 0.0
        %809 = vmatprep.subr.mxu0 0.0
        %810 = vmatpush1.msra.mxu0 0.0
        %811 = vmatprep.subr.mxu0 0.0
        %812 = vmatpush1.msra.mxu0 0.0
        %813 = vmatprep.subr.mxu0 0.0
        %814 = vmatpush1.msra.mxu0 0.0
        %815 = vmatprep.subr.mxu0 0.0
        %816 = vmatpush1.msra.mxu0 0.0
        %817 = vmatprep.mubr.f32.mxu0 0.0
        %818 = vmatmul.mubr.f32.gmra.mrb[0].mxu0 %v751
        %v819 = vpop.f32.mrb[0].mxu0
        %v820 = vadd.f32 %v675, %v819
        %v821 = vpop.f32.mrb[0].mxu0
        %822 = vdwg.mxu0
        %825 = vrot.lane.b32.xlu0 %v746, 8
        %v826 = vpop.permute.xlu0 %825
        %827 = vrot.lane.b32.xlu0 %v820, 8
        %v828 = vpop.permute.xlu0 %827
        %vm831 = vcmask 126016
        %832 = vst.msk [vmem:[%s294] sm:$0xf] %vm831, %v826
        %833 = vst.msk [vmem:[%s294 + $0x4] sm:$0xf] %vm831, %v828
        %834 = vrot.lane.b32.xlu0 %v435, 120
        %v835 = vpop.permute.xlu0 %834
        %836 = vrot.lane.b32.xlu0 %v518, 112
        %v837 = vpop.permute.xlu0 %836
        %v839 = vsel %vm360, %v835, 0
        %841 = vmatprep.subr.mxu0 0.0
        %842 = vmatpush1.msra.mxu0 %v524
        %843 = vmatprep.subr.mxu0 0.0
        %844 = vmatpush1.msra.mxu0 0.0
        %845 = vmatprep.subr.mxu0 0.0
        %846 = vmatpush1.msra.mxu0 0.0
        %847 = vmatprep.subr.mxu0 0.0
        %848 = vmatpush1.msra.mxu0 0.0
        %849 = vmatprep.subr.mxu0 0.0
        %850 = vmatpush1.msra.mxu0 0.0
        %851 = vmatprep.subr.mxu0 0.0
        %852 = vmatpush1.msra.mxu0 0.0
        %853 = vmatprep.subr.mxu0 0.0
        %854 = vmatpush1.msra.mxu0 0.0
        %855 = vmatprep.subr.mxu0 0.0
        %856 = vmatpush1.msra.mxu0 0.0
        %857 = vmatprep.subr.mxu0 0.0
        %858 = vmatpush1.msra.mxu0 0.0
        %859 = vmatprep.subr.mxu0 0.0
        %860 = vmatpush1.msra.mxu0 0.0
        %861 = vmatprep.subr.mxu0 0.0
        %862 = vmatpush1.msra.mxu0 0.0
        %863 = vmatprep.subr.mxu0 0.0
        %864 = vmatpush1.msra.mxu0 0.0
        %865 = vmatprep.subr.mxu0 0.0
        %866 = vmatpush1.msra.mxu0 0.0
        %867 = vmatprep.subr.mxu0 0.0
        %868 = vmatpush1.msra.mxu0 0.0
        %869 = vmatprep.subr.mxu0 0.0
        %870 = vmatpush1.msra.mxu0 0.0
        %871 = vmatprep.subr.mxu0 0.0
        %872 = vmatpush1.msra.mxu0 0.0
        %873 = vmatprep.subr.mxu0 0.0
        %874 = vmatpush1.msra.mxu0 0.0
        %875 = vmatprep.subr.mxu0 0.0
        %876 = vmatpush1.msra.mxu0 0.0
        %877 = vmatprep.subr.mxu0 0.0
        %878 = vmatpush1.msra.mxu0 0.0
        %879 = vmatprep.subr.mxu0 0.0
        %880 = vmatpush1.msra.mxu0 0.0
        %881 = vmatprep.subr.mxu0 0.0
        %882 = vmatpush1.msra.mxu0 0.0
        %883 = vmatprep.subr.mxu0 0.0
        %884 = vmatpush1.msra.mxu0 0.0
        %885 = vmatprep.subr.mxu0 0.0
        %886 = vmatpush1.msra.mxu0 0.0
        %887 = vmatprep.subr.mxu0 0.0
        %888 = vmatpush1.msra.mxu0 0.0
        %889 = vmatprep.subr.mxu0 0.0
        %890 = vmatpush1.msra.mxu0 0.0
        %891 = vmatprep.subr.mxu0 0.0
        %892 = vmatpush1.msra.mxu0 0.0
        %893 = vmatprep.subr.mxu0 0.0
        %894 = vmatpush1.msra.mxu0 0.0
        %895 = vmatprep.subr.mxu0 0.0
        %896 = vmatpush1.msra.mxu0 0.0
        %897 = vmatprep.subr.mxu0 0.0
        %898 = vmatpush1.msra.mxu0 0.0
        %899 = vmatprep.subr.mxu0 0.0
        %900 = vmatpush1.msra.mxu0 0.0
        %901 = vmatprep.subr.mxu0 0.0
        %902 = vmatpush1.msra.mxu0 0.0
        %903 = vmatprep.subr.mxu0 0.0
        %904 = vmatpush1.msra.mxu0 0.0
        %905 = vmatprep.mubr.f32.mxu0 0.0
        %906 = vmatmul.mubr.f32.gmra.mrb[0].mxu0 %v839
        %v907 = vpop.f32.mrb[0].mxu0
        %v908 = vadd.f32 %v837, %v907
        %v909 = vpop.f32.mrb[0].mxu0
        %910 = vdwg.mxu0
        %911 = vrot.lane.b32.xlu0 %v511, 120
        %v912 = vpop.permute.xlu0 %911
        %v913 = vsel %vm360, %v912, 0
        %915 = vmatprep.subr.mxu0 0.0
        %916 = vmatpush1.msra.mxu0 %v524
        %917 = vmatprep.subr.mxu0 0.0
        %918 = vmatpush1.msra.mxu0 0.0
        %919 = vmatprep.subr.mxu0 0.0
        %920 = vmatpush1.msra.mxu0 0.0
        %921 = vmatprep.subr.mxu0 0.0
        %922 = vmatpush1.msra.mxu0 0.0
        %923 = vmatprep.subr.mxu0 0.0
        %924 = vmatpush1.msra.mxu0 0.0
        %925 = vmatprep.subr.mxu0 0.0
        %926 = vmatpush1.msra.mxu0 0.0
        %927 = vmatprep.subr.mxu0 0.0
        %928 = vmatpush1.msra.mxu0 0.0
        %929 = vmatprep.subr.mxu0 0.0
        %930 = vmatpush1.msra.mxu0 0.0
        %931 = vmatprep.subr.mxu0 0.0
        %932 = vmatpush1.msra.mxu0 0.0
        %933 = vmatprep.subr.mxu0 0.0
        %934 = vmatpush1.msra.mxu0 0.0
        %935 = vmatprep.subr.mxu0 0.0
        %936 = vmatpush1.msra.mxu0 0.0
        %937 = vmatprep.subr.mxu0 0.0
        %938 = vmatpush1.msra.mxu0 0.0
        %939 = vmatprep.subr.mxu0 0.0
        %940 = vmatpush1.msra.mxu0 0.0
        %941 = vmatprep.subr.mxu0 0.0
        %942 = vmatpush1.msra.mxu0 0.0
        %943 = vmatprep.subr.mxu0 0.0
        %944 = vmatpush1.msra.mxu0 0.0
        %945 = vmatprep.subr.mxu0 0.0
        %946 = vmatpush1.msra.mxu0 0.0
        %947 = vmatprep.subr.mxu0 0.0
        %948 = vmatpush1.msra.mxu0 0.0
        %949 = vmatprep.subr.mxu0 0.0
        %950 = vmatpush1.msra.mxu0 0.0
        %951 = vmatprep.subr.mxu0 0.0
        %952 = vmatpush1.msra.mxu0 0.0
        %953 = vmatprep.subr.mxu0 0.0
        %954 = vmatpush1.msra.mxu0 0.0
        %955 = vmatprep.subr.mxu0 0.0
        %956 = vmatpush1.msra.mxu0 0.0
        %957 = vmatprep.subr.mxu0 0.0
        %958 = vmatpush1.msra.mxu0 0.0
        %959 = vmatprep.subr.mxu0 0.0
        %960 = vmatpush1.msra.mxu0 0.0
        %961 = vmatprep.subr.mxu0 0.0
        %962 = vmatpush1.msra.mxu0 0.0
        %963 = vmatprep.subr.mxu0 0.0
        %964 = vmatpush1.msra.mxu0 0.0
        %965 = vmatprep.subr.mxu0 0.0
        %966 = vmatpush1.msra.mxu0 0.0
        %967 = vmatprep.subr.mxu0 0.0
        %968 = vmatpush1.msra.mxu0 0.0
        %969 = vmatprep.subr.mxu0 0.0
        %970 = vmatpush1.msra.mxu0 0.0
        %971 = vmatprep.subr.mxu0 0.0
        %972 = vmatpush1.msra.mxu0 0.0
        %973 = vmatprep.subr.mxu0 0.0
        %974 = vmatpush1.msra.mxu0 0.0
        %975 = vmatprep.subr.mxu0 0.0
        %976 = vmatpush1.msra.mxu0 0.0
        %977 = vmatprep.subr.mxu0 0.0
        %978 = vmatpush1.msra.mxu0 0.0
        %979 = vmatprep.mubr.f32.mxu0 0.0
        %980 = vmatmul.mubr.f32.gmra.mrb[0].mxu0 %v913
        %v981 = vpop.f32.mrb[0].mxu0
        %v982 = vadd.f32 %v837, %v981
        %v983 = vpop.f32.mrb[0].mxu0
        %984 = vdwg.mxu0
        %987 = vrot.lane.b32.xlu0 %v908, 16
        %v988 = vpop.permute.xlu0 %987
        %989 = vrot.lane.b32.xlu0 %v982, 16
        %v990 = vpop.permute.xlu0 %989
        %vm993 = vcmask 191616
        %994 = vst.msk [vmem:[%s294] sm:$0xf] %vm993, %v988
        %995 = vst.msk [vmem:[%s294 + $0x4] sm:$0xf] %vm993, %v990
        %996 = vrot.lane.b32.xlu0 %v435, 116
        %v997 = vpop.permute.xlu0 %996
        %998 = vrot.lane.b32.xlu0 %v518, 104
        %v999 = vpop.permute.xlu0 %998
        %v1001 = vsel %vm360, %v997, 0
        %1003 = vmatprep.subr.mxu0 0.0
        %1004 = vmatpush1.msra.mxu0 %v524
        %1005 = vmatprep.subr.mxu0 0.0
        %1006 = vmatpush1.msra.mxu0 0.0
        %1007 = vmatprep.subr.mxu0 0.0
        %1008 = vmatpush1.msra.mxu0 0.0
        %1009 = vmatprep.subr.mxu0 0.0
        %1010 = vmatpush1.msra.mxu0 0.0
        %1011 = vmatprep.subr.mxu0 0.0
        %1012 = vmatpush1.msra.mxu0 0.0
        %1013 = vmatprep.subr.mxu0 0.0
        %1014 = vmatpush1.msra.mxu0 0.0
        %1015 = vmatprep.subr.mxu0 0.0
        %1016 = vmatpush1.msra.mxu0 0.0
        %1017 = vmatprep.subr.mxu0 0.0
        %1018 = vmatpush1.msra.mxu0 0.0
        %1019 = vmatprep.subr.mxu0 0.0
        %1020 = vmatpush1.msra.mxu0 0.0
        %1021 = vmatprep.subr.mxu0 0.0
        %1022 = vmatpush1.msra.mxu0 0.0
        %1023 = vmatprep.subr.mxu0 0.0
        %1024 = vmatpush1.msra.mxu0 0.0
        %1025 = vmatprep.subr.mxu0 0.0
        %1026 = vmatpush1.msra.mxu0 0.0
        %1027 = vmatprep.subr.mxu0 0.0
        %1028 = vmatpush1.msra.mxu0 0.0
        %1029 = vmatprep.subr.mxu0 0.0
        %1030 = vmatpush1.msra.mxu0 0.0
        %1031 = vmatprep.subr.mxu0 0.0
        %1032 = vmatpush1.msra.mxu0 0.0
        %1033 = vmatprep.subr.mxu0 0.0
        %1034 = vmatpush1.msra.mxu0 0.0
        %1035 = vmatprep.subr.mxu0 0.0
        %1036 = vmatpush1.msra.mxu0 0.0
        %1037 = vmatprep.subr.mxu0 0.0
        %1038 = vmatpush1.msra.mxu0 0.0
        %1039 = vmatprep.subr.mxu0 0.0
        %1040 = vmatpush1.msra.mxu0 0.0
        %1041 = vmatprep.subr.mxu0 0.0
        %1042 = vmatpush1.msra.mxu0 0.0
        %1043 = vmatprep.subr.mxu0 0.0
        %1044 = vmatpush1.msra.mxu0 0.0
        %1045 = vmatprep.subr.mxu0 0.0
        %1046 = vmatpush1.msra.mxu0 0.0
        %1047 = vmatprep.subr.mxu0 0.0
        %1048 = vmatpush1.msra.mxu0 0.0
        %1049 = vmatprep.subr.mxu0 0.0
        %1050 = vmatpush1.msra.mxu0 0.0
        %1051 = vmatprep.subr.mxu0 0.0
        %1052 = vmatpush1.msra.mxu0 0.0
        %1053 = vmatprep.subr.mxu0 0.0
        %1054 = vmatpush1.msra.mxu0 0.0
        %1055 = vmatprep.subr.mxu0 0.0
        %1056 = vmatpush1.msra.mxu0 0.0
        %1057 = vmatprep.subr.mxu0 0.0
        %1058 = vmatpush1.msra.mxu0 0.0
        %1059 = vmatprep.subr.mxu0 0.0
        %1060 = vmatpush1.msra.mxu0 0.0
        %1061 = vmatprep.subr.mxu0 0.0
        %1062 = vmatpush1.msra.mxu0 0.0
        %1063 = vmatprep.subr.mxu0 0.0
        %1064 = vmatpush1.msra.mxu0 0.0
        %1065 = vmatprep.subr.mxu0 0.0
        %1066 = vmatpush1.msra.mxu0 0.0
        %1067 = vmatprep.mubr.f32.mxu0 0.0
        %1068 = vmatmul.mubr.f32.gmra.mrb[0].mxu0 %v1001
        %v1069 = vpop.f32.mrb[0].mxu0
        %v1070 = vadd.f32 %v999, %v1069
        %v1071 = vpop.f32.mrb[0].mxu0
        %1072 = vdwg.mxu0
        %1073 = vrot.lane.b32.xlu0 %v511, 116
        %v1074 = vpop.permute.xlu0 %1073
        %v1075 = vsel %vm360, %v1074, 0
        %1077 = vmatprep.subr.mxu0 0.0
        %1078 = vmatpush1.msra.mxu0 %v524
        %1079 = vmatprep.subr.mxu0 0.0
        %1080 = vmatpush1.msra.mxu0 0.0
        %1081 = vmatprep.subr.mxu0 0.0
        %1082 = vmatpush1.msra.mxu0 0.0
        %1083 = vmatprep.subr.mxu0 0.0
        %1084 = vmatpush1.msra.mxu0 0.0
        %1085 = vmatprep.subr.mxu0 0.0
        %1086 = vmatpush1.msra.mxu0 0.0
        %1087 = vmatprep.subr.mxu0 0.0
        %1088 = vmatpush1.msra.mxu0 0.0
        %1089 = vmatprep.subr.mxu0 0.0
        %1090 = vmatpush1.msra.mxu0 0.0
        %1091 = vmatprep.subr.mxu0 0.0
        %1092 = vmatpush1.msra.mxu0 0.0
        %1093 = vmatprep.subr.mxu0 0.0
        %1094 = vmatpush1.msra.mxu0 0.0
        %1095 = vmatprep.subr.mxu0 0.0
        %1096 = vmatpush1.msra.mxu0 0.0
        %1097 = vmatprep.subr.mxu0 0.0
        %1098 = vmatpush1.msra.mxu0 0.0
        %1099 = vmatprep.subr.mxu0 0.0
        %1100 = vmatpush1.msra.mxu0 0.0
        %1101 = vmatprep.subr.mxu0 0.0
        %1102 = vmatpush1.msra.mxu0 0.0
        %1103 = vmatprep.subr.mxu0 0.0
        %1104 = vmatpush1.msra.mxu0 0.0
        %1105 = vmatprep.subr.mxu0 0.0
        %1106 = vmatpush1.msra.mxu0 0.0
        %1107 = vmatprep.subr.mxu0 0.0
        %1108 = vmatpush1.msra.mxu0 0.0
        %1109 = vmatprep.subr.mxu0 0.0
        %1110 = vmatpush1.msra.mxu0 0.0
        %1111 = vmatprep.subr.mxu0 0.0
        %1112 = vmatpush1.msra.mxu0 0.0
        %1113 = vmatprep.subr.mxu0 0.0
        %1114 = vmatpush1.msra.mxu0 0.0
        %1115 = vmatprep.subr.mxu0 0.0
        %1116 = vmatpush1.msra.mxu0 0.0
        %1117 = vmatprep.subr.mxu0 0.0
        %1118 = vmatpush1.msra.mxu0 0.0
        %1119 = vmatprep.subr.mxu0 0.0
        %1120 = vmatpush1.msra.mxu0 0.0
        %1121 = vmatprep.subr.mxu0 0.0
        %1122 = vmatpush1.msra.mxu0 0.0
        %1123 = vmatprep.subr.mxu0 0.0
        %1124 = vmatpush1.msra.mxu0 0.0
        %1125 = vmatprep.subr.mxu0 0.0
        %1126 = vmatpush1.msra.mxu0 0.0
        %1127 = vmatprep.subr.mxu0 0.0
        %1128 = vmatpush1.msra.mxu0 0.0
        %1129 = vmatprep.subr.mxu0 0.0
        %1130 = vmatpush1.msra.mxu0 0.0
        %1131 = vmatprep.subr.mxu0 0.0
        %1132 = vmatpush1.msra.mxu0 0.0
        %1133 = vmatprep.subr.mxu0 0.0
        %1134 = vmatpush1.msra.mxu0 0.0
        %1135 = vmatprep.subr.mxu0 0.0
        %1136 = vmatpush1.msra.mxu0 0.0
        %1137 = vmatprep.subr.mxu0 0.0
        %1138 = vmatpush1.msra.mxu0 0.0
        %1139 = vmatprep.subr.mxu0 0.0
        %1140 = vmatpush1.msra.mxu0 0.0
        %1141 = vmatprep.mubr.f32.mxu0 0.0
        %1142 = vmatmul.mubr.f32.gmra.mrb[0].mxu0 %v1075
        %v1143 = vpop.f32.mrb[0].mxu0
        %v1144 = vadd.f32 %v999, %v1143
        %v1145 = vpop.f32.mrb[0].mxu0
        %1146 = vdwg.mxu0
        %1149 = vrot.lane.b32.xlu0 %v1070, 24
        %v1150 = vpop.permute.xlu0 %1149
        %1151 = vrot.lane.b32.xlu0 %v1144, 24
        %v1152 = vpop.permute.xlu0 %1151
        %vm1155 = vcmask 257216
        %1156 = vst.msk [vmem:[%s294] sm:$0xf] %vm1155, %v1150
        %1157 = vst.msk [vmem:[%s294 + $0x4] sm:$0xf] %vm1155, %v1152
        %s1158 = sand.u32 %s140, 1
        %s1159 = sand.u32 %s140, 1
        %s1160 = smul.addr %s1159, 8
        %s1161 = scalar_lea.vmem [#allocation4], %s1160
        // Predicated region
        $region78: #{dense_gcn_conv2d_forward.1} parent=72 // pred_check
          %p1162 = pneg %p150
        $region79: #{dense_gcn_conv2d_forward.1} parent=72 // pred_check_branch
          %1164 = sbr.rel (%p1162) target = $region81
        $region80: #{dense_gcn_conv2d_forward.1} parent=72 // pred_region
          %s1165 = smul.u32 2, %s20
          %s1166 = smul.addr %s1165, 4
          %s1167 = sadd.s32 %s19, %s1166
          %s1168 = smul.addr %s1167, 4
          %s1169 = scalar_lea.vmem %s4, %s1168
          // Predicated region
          $region82: #{dense_gcn_conv2d_forward.1} parent=80 // pred_check
            _
          $region83: #{dense_gcn_conv2d_forward.1} parent=80 // pred_check_branch
            %1171 = sbr.rel (0) target = $region85
          $region84: #{dense_gcn_conv2d_forward.1} parent=80 // pred_region
            // Predicated region
            $region86: #{dense_gcn_conv2d_forward.1} parent=84 // pred_check
              _
            $region87: #{dense_gcn_conv2d_forward.1} parent=84 // pred_check_branch
              %1173 = sbr.rel target = $region89
            $region88: #{dense_gcn_conv2d_forward.1} parent=84 // pred_region
              // Predicated region
              $region101: #{dense_gcn_conv2d_forward.1} parent=88 // pred_check
                _
              $region102: #{dense_gcn_conv2d_forward.1} parent=88 // pred_check_branch
                %1190 = sbr.rel (0) target = $region104
              $region103: #{dense_gcn_conv2d_forward.1} parent=88 // pred_region
                loop: start=0, step=1, limit=1
                $region105: #{dense_gcn_conv2d_forward.1} parent=103 // loop_pre_header
                  _
                $region106: #{dense_gcn_conv2d_forward.1} parent=103 // loop_header
                  %s1192 = sphi 0, %s1196
                  %p1193 = scmp.ge.s32.totalorder %s1192, 1
                  %s1197 = sphi %s1161, %s1161
                  %s1198 = sphi %s1169, %s1169
                $region107: #{dense_gcn_conv2d_forward.1} parent=103 // loop_header_branch
                  %1195 = sbr.rel (%p1193) target = $region111
                $region108: #{dense_gcn_conv2d_forward.1} parent=103 // loop_body
                  _
                $region109: #{dense_gcn_conv2d_forward.1} parent=103 // loop_footer
                  %s1196 = sadd.s32 1, %s1192
                $region110: #{dense_gcn_conv2d_forward.1} parent=103 // loop_footer_branch
                  %1191 = sbr.rel target = $region106
                $region111: #{dense_gcn_conv2d_forward.1} parent=103 // loop_exit
                  _
                loop: start=0, step=1, limit=1
                $region112: #{dense_gcn_conv2d_forward.1} parent=103 // loop_pre_header
                  _
                $region113: #{dense_gcn_conv2d_forward.1} parent=103 // loop_header
                  %s1201 = sphi 0, %s1205
                  %p1202 = scmp.ge.s32.totalorder %s1201, 1
                  %s1206 = sphi %s1161, %s1161
                  %s1207 = sphi %s1169, %s1169
                $region114: #{dense_gcn_conv2d_forward.1} parent=103 // loop_header_branch
                  %1204 = sbr.rel (%p1202) target = $region118
                $region115: #{dense_gcn_conv2d_forward.1} parent=103 // loop_body
                  %v1208 = vld [vmem:[%s1206] sm:$0xf]
                  %1209 = vst [vmem:[%s1207] sm:$0xf] %v1208
                  %v1210 = vld [vmem:[%s1206 + $0x4] sm:$0xf]
                  %1211 = vst [vmem:[%s1207 + $0x10] sm:$0xf] %v1210
                $region116: #{dense_gcn_conv2d_forward.1} parent=103 // loop_footer
                  %s1205 = sadd.s32 1, %s1201
                $region117: #{dense_gcn_conv2d_forward.1} parent=103 // loop_footer_branch
                  %1200 = sbr.rel target = $region113
                $region118: #{dense_gcn_conv2d_forward.1} parent=103 // loop_exit
                  _
              $region104: #{dense_gcn_conv2d_forward.1} parent=88 // pred_fallthru
                _
            $region89: #{dense_gcn_conv2d_forward.1} parent=84 // pred_fallthru
              _
            // Predicated region
            $region90: #{dense_gcn_conv2d_forward.1} parent=84 // pred_check
              _
            $region91: #{dense_gcn_conv2d_forward.1} parent=84 // pred_check_branch
              %1175 = sbr.rel (0) target = $region93
            $region92: #{dense_gcn_conv2d_forward.1} parent=84 // pred_region
              loop: start=0, step=1, limit=1
              $region94: #{dense_gcn_conv2d_forward.1} parent=92 // loop_pre_header
                _
              $region95: #{dense_gcn_conv2d_forward.1} parent=92 // loop_header
                %s1178 = sphi 0, %s1182
                %p1179 = scmp.ge.s32.totalorder %s1178, 1
                %s1183 = sphi %s1161, %s1161
                %s1184 = sphi %s1169, %s1169
              $region96: #{dense_gcn_conv2d_forward.1} parent=92 // loop_header_branch
                %1181 = sbr.rel (%p1179) target = $region100
              $region97: #{dense_gcn_conv2d_forward.1} parent=92 // loop_body
                %v1185 = vld [vmem:[%s1183] sm:$0xf]
                %1186 = vst [vmem:[%s1184] sm:$0xf] %v1185
                %v1187 = vld [vmem:[%s1183 + $0x4] sm:$0xf]
                %1188 = vst [vmem:[%s1184 + $0x10] sm:$0xf] %v1187
              $region98: #{dense_gcn_conv2d_forward.1} parent=92 // loop_footer
                %s1182 = sadd.s32 1, %s1178
              $region99: #{dense_gcn_conv2d_forward.1} parent=92 // loop_footer_branch
                %1177 = sbr.rel target = $region95
              $region100: #{dense_gcn_conv2d_forward.1} parent=92 // loop_exit
                _
            $region93: #{dense_gcn_conv2d_forward.1} parent=84 // pred_fallthru
              _
          $region85: #{dense_gcn_conv2d_forward.1} parent=80 // pred_fallthru
            _
          %1212 = vnop
        $region81: #{dense_gcn_conv2d_forward.1} parent=72 // pred_fallthru
          _
      $region73: #{dense_gcn_conv2d_forward.1} parent=5 // pred_fallthru
        _
      %p1213 = scmp.le.s32.totalorder 2, %s10
      // Predicated region
      $region119: #{dense_gcn_conv2d_forward.1} parent=5 // pred_check
        %p1214 = pneg %p1213
      $region120: #{dense_gcn_conv2d_forward.1} parent=5 // pred_check_branch
        %1216 = sbr.rel (%p1214) target = $region122
      $region121: #{dense_gcn_conv2d_forward.1} parent=5 // pred_region
        %s1217 = ssub.s32 %s10, 2
        // Predicated region
        $region123: #{dense_gcn_conv2d_forward.1} parent=121 // pred_check
          %p1218 = pneg %p156
        $region124: #{dense_gcn_conv2d_forward.1} parent=121 // pred_check_branch
          %1220 = sbr.rel (%p1218) target = $region126
        $region125: #{dense_gcn_conv2d_forward.1} parent=121 // pred_region
          %s1221 = sand.u32 %s141, 1
          %s1222 = sand.u32 %s141, 1
          %s1223 = smul.addr %s1222, 8
          %s1224 = scalar_lea.vmem [#allocation4], %s1223
        $region126: #{dense_gcn_conv2d_forward.1} parent=121 // pred_fallthru
          _
      $region122: #{dense_gcn_conv2d_forward.1} parent=5 // pred_fallthru
        _
    $region6: #{dense_gcn_conv2d_forward.1} parent=1 // loop_footer
      %s14 = sadd.s32 1, %s10
    $region7: #{dense_gcn_conv2d_forward.1} parent=1 // loop_footer_branch
      %9 = sbr.rel target = $region3
    $region8: #{dense_gcn_conv2d_forward.1} parent=1 // loop_exit
      _

</llo_original>
